<compile_context>
chip_gen: v6e
topology: v6e:2x2x1
jax: 0.10.0
libtpu: 0.0.40
codegen_flags: <defaults>
</compile_context>

<pallas_src>
import jax
import jax.numpy as jnp
import numpy as np
from jax import lax
from jax.experimental import pallas as pl
from jax.experimental.pallas import tpu as pltpu


def conv_transpose2d_pallas(x, weight, bias, *, use_bf16=False):
    """ConvTranspose2d(kernel=4, stride=2, padding=1).

    x: (N, Cin, H, W) NCHW.  weight: (Cin, Cout, 4, 4) (PyTorch ConvTranspose2d
    layout).  bias: (Cout,).  Returns (N, Cout, 2H, 2W)."""
    N, Cin, H, W = x.shape
    Cout = weight.shape[1]
    KO = 4 * Cout              # fused parity channels, ordered (ph, pw, Cout)
    Wp = W + 2                 # padded width (one junk column on each side)
    S = (H + 4) * Wp           # flattened padded spatial extent
    Mt = H * Wp                # matmul columns per image (includes junk cols)

    # ---------- single-pass host-side prep (channel-major, no transpose) -------
    xp = jnp.pad(x, ((0, 0), (0, 0), (2, 2), (1, 1)))     # (N, Cin, H+4, W+2)
    xf = xp.reshape(N, Cin, S)

    # For output parity p, the contributing (input offset d -> kernel tap k)
    # pairs of ConvTranspose2d(k=4, s=2, p=1) are:
    #   p=0 -> {d=0: k=1, d=-1: k=3},   p=1 -> {d=+1: k=0, d=0: k=2}
    kmap = {0: {0: 1, -1: 3}, 1: {1: 0, 0: 2}}

    zero_blk = jnp.zeros((Cout, Cin), weight.dtype)
    per_shift = []        # packed weights, one (4*Cout, Cin) block per (dh, dw)
    shift_starts = []     # static lane start of each shifted window in the slab
    for dh in (-1, 0, 1):
        for dw in (-1, 0, 1):
            rows = []
            for ph in (0, 1):
                for pw in (0, 1):
                    kh = kmap[ph].get(dh)
                    kw = kmap[pw].get(dw)
                    rows.append(zero_blk if (kh is None or kw is None)
                                else weight[:, :, kh, kw].T)     # (Cout, Cin)
            per_shift.append(jnp.concatenate(rows, axis=0))      # (KO, Cin)
            shift_starts.append((2 + dh) * Wp + dw)              # always in-bounds

    Ws = jnp.stack(per_shift, axis=0)                            # (9, KO, Cin)
    b2 = jnp.tile(bias.astype(jnp.float32), 4).reshape(KO, 1)    # (KO, 1)

    if use_bf16:  # bf16 operands, f32 accumulation (recommended on v6e/v7x)
        xf = xf.astype(jnp.bfloat16)
        Ws = Ws.astype(jnp.bfloat16)

    out_dtype = x.dtype

    # ---------- Pallas kernel --------------------------------------------------
    def kernel(x_ref, w_ref, b_ref, o_ref):
        # x_ref: (Cin, S)   flattened, zero-padded image of one batch element
        # w_ref: (9, KO, Cin) per-shift fused-parity weights (resident)
        # b_ref: (KO, 1)    bias tiled over the 4 parities
        # o_ref: (KO, Mt)   fused-parity output, spatial extent on the lane axis
        acc = jnp.zeros((KO, Mt), jnp.float32)
        for s in range(9):  # unrolled: static lane-window slices of the slab
            xs = x_ref[:, pl.ds(shift_starts[s], Mt)]            # (Cin, Mt)
            acc = acc + jnp.dot(w_ref[s], xs,
                                preferred_element_type=jnp.float32)
        o_ref[...] = (acc + b_ref[...]).astype(o_ref.dtype)

    out_k = pl.pallas_call(
        kernel,
        out_shape=jax.ShapeDtypeStruct((N, KO, Mt), out_dtype),
        grid_spec=pltpu.PrefetchScalarGridSpec(
            num_scalar_prefetch=0,
            grid=(N,),
            in_specs=[
                pl.BlockSpec((None, Cin, S), lambda n: (n, 0, 0)),
                pl.BlockSpec((9, KO, Cin), lambda n: (0, 0, 0)),
                pl.BlockSpec((KO, 1), lambda n: (0, 0)),
            ],
            out_specs=pl.BlockSpec((None, KO, Mt), lambda n: (n, 0, 0)),
        ),
        compiler_params=pltpu.CompilerParams(
            dimension_semantics=("parallel",),
            vmem_limit_bytes=48 * 1024 * 1024),
    )(xf, Ws, b2)

    # ---------- single-pass output de-interleave (tiny, XLA layout plumbing) ---
    # (N, KO, Mt) -> (N, ph, pw, Cout, H, W+2) -> drop junk cols -> NCHW 2H x 2W
    out6 = out_k.reshape(N, 2, 2, Cout, H, Wp)[:, :, :, :, :, 1:W + 1]
    out = jnp.transpose(out6, (0, 3, 4, 1, 5, 2)).reshape(N, Cout, 2 * H, 2 * W)
    return out


def conv_transpose2d_reference(x, weight, bias):
    # ConvTranspose2d(k=4,s=2,p=1) == forward conv on 2x-dilated input,
    # padding k-1-p = 2, spatially flipped + channel-transposed kernel.
    rhs = jnp.flip(jnp.transpose(weight, (1, 0, 2, 3)), (2, 3))  # (Cout, Cin, 4, 4)
    y = lax.conv_general_dilated(
        x, rhs, window_strides=(1, 1), padding=((2, 2), (2, 2)),
        lhs_dilation=(2, 2), dimension_numbers=('NCHW', 'OIHW', 'NCHW'))
    return y + bias[None, :, None, None]


if __name__ == "__main__":
    key = jax.random.PRNGKey(0)
    k_w, k_b, k_x = jax.random.split(key, 3)

    dim = 4            # channels (in == out, per the module)
    N, H, W = 2, 16, 16

    weight = jax.random.normal(k_w, (dim, dim, 4, 4), jnp.float32) * 0.1
    bias = jax.random.normal(k_b, (dim,), jnp.float32) * 0.1
    x = jax.random.normal(k_x, (N, dim, H, W), jnp.float32)

    out = jax.block_until_ready(conv_transpose2d_pallas(x, weight, bias))
    ref = jax.block_until_ready(conv_transpose2d_reference(x, weight, bias))

    assert out.shape == (N, dim, 2 * H, 2 * W)
    assert np.allclose(np.asarray(out), np.asarray(ref), atol=1e-4, rtol=1e-4)

    print("KERNEL_OK")
</pallas_src>

<mosaic_0001>
module attributes {stable_mosaic.version = 11 : i64} {
  func.func @kernel(%arg0: i32, %arg1: memref<1x4x360xf32, #tpu.memory_space<vmem>>, %arg2: memref<9x16x4xf32, #tpu.memory_space<vmem>>, %arg3: memref<16x1xf32, #tpu.memory_space<vmem>>, %arg4: memref<1x16x288xf32, #tpu.memory_space<vmem>>) attributes {dimension_semantics = [#tpu.dimension_semantics<parallel>], iteration_bounds = array<i64: 2>, scalar_prefetch = 0 : i64, scratch_operands = 0 : i64, tpu.core_type = #tpu.core_type<tc>, window_params = [{transform_indices = @transform_0, window_bounds = array<i64: 1, 4, 360>}, {pipeline_mode = #tpu.pipeline_mode<synchronous>, transform_indices = @transform_1, window_bounds = array<i64: 9, 16, 4>}, {pipeline_mode = #tpu.pipeline_mode<synchronous>, transform_indices = @transform_2, window_bounds = array<i64: 16, 1>}, {transform_indices = @transform_3, window_bounds = array<i64: 1, 16, 288>}]} {
    %cst = arith.constant 0.000000e+00 : f32
    %0 = vector.broadcast %cst : f32 to vector<16x288xf32>
    %c0 = arith.constant 0 : index
    %c0_0 = arith.constant 0 : index
    %c17 = arith.constant 17 : index
    %1 = vector.load %arg1[%c0, %c0_0, %c17] : memref<1x4x360xf32, #tpu.memory_space<vmem>>, vector<1x4x288xf32>
    %2 = vector.shape_cast %1 : vector<1x4x288xf32> to vector<4x288xf32>
    %c0_1 = arith.constant 0 : index
    %c0_2 = arith.constant 0 : index
    %c0_3 = arith.constant 0 : index
    %3 = vector.load %arg2[%c0_1, %c0_2, %c0_3] : memref<9x16x4xf32, #tpu.memory_space<vmem>>, vector<1x16x4xf32>
    %4 = vector.shape_cast %3 : vector<1x16x4xf32> to vector<16x4xf32>
    %cst_4 = arith.constant dense<0.000000e+00> : vector<16x288xf32>
    %5 = tpu.matmul %4, %2, %cst_4 {dimension_numbers = #tpu.dot_dimension_numbers<[1], [0], [0], [1], [0, 0, 1, 1], [], []>} : vector<16x4xf32>, vector<4x288xf32>, vector<16x288xf32> -> vector<16x288xf32>
    %6 = arith.addf %0, %5 : vector<16x288xf32>
    %c0_5 = arith.constant 0 : index
    %c0_6 = arith.constant 0 : index
    %c18 = arith.constant 18 : index
    %7 = vector.load %arg1[%c0_5, %c0_6, %c18] : memref<1x4x360xf32, #tpu.memory_space<vmem>>, vector<1x4x288xf32>
    %8 = vector.shape_cast %7 : vector<1x4x288xf32> to vector<4x288xf32>
    %c1 = arith.constant 1 : index
    %c0_7 = arith.constant 0 : index
    %c0_8 = arith.constant 0 : index
    %9 = vector.load %arg2[%c1, %c0_7, %c0_8] : memref<9x16x4xf32, #tpu.memory_space<vmem>>, vector<1x16x4xf32>
    %10 = vector.shape_cast %9 : vector<1x16x4xf32> to vector<16x4xf32>
    %cst_9 = arith.constant dense<0.000000e+00> : vector<16x288xf32>
    %11 = tpu.matmul %10, %8, %cst_9 {dimension_numbers = #tpu.dot_dimension_numbers<[1], [0], [0], [1], [0, 0, 1, 1], [], []>} : vector<16x4xf32>, vector<4x288xf32>, vector<16x288xf32> -> vector<16x288xf32>
    %12 = arith.addf %6, %11 : vector<16x288xf32>
    %c0_10 = arith.constant 0 : index
    %c0_11 = arith.constant 0 : index
    %c19 = arith.constant 19 : index
    %13 = vector.load %arg1[%c0_10, %c0_11, %c19] : memref<1x4x360xf32, #tpu.memory_space<vmem>>, vector<1x4x288xf32>
    %14 = vector.shape_cast %13 : vector<1x4x288xf32> to vector<4x288xf32>
    %c2 = arith.constant 2 : index
    %c0_12 = arith.constant 0 : index
    %c0_13 = arith.constant 0 : index
    %15 = vector.load %arg2[%c2, %c0_12, %c0_13] : memref<9x16x4xf32, #tpu.memory_space<vmem>>, vector<1x16x4xf32>
    %16 = vector.shape_cast %15 : vector<1x16x4xf32> to vector<16x4xf32>
    %cst_14 = arith.constant dense<0.000000e+00> : vector<16x288xf32>
    %17 = tpu.matmul %16, %14, %cst_14 {dimension_numbers = #tpu.dot_dimension_numbers<[1], [0], [0], [1], [0, 0, 1, 1], [], []>} : vector<16x4xf32>, vector<4x288xf32>, vector<16x288xf32> -> vector<16x288xf32>
    %18 = arith.addf %12, %17 : vector<16x288xf32>
    %c0_15 = arith.constant 0 : index
    %c0_16 = arith.constant 0 : index
    %c35 = arith.constant 35 : index
    %19 = vector.load %arg1[%c0_15, %c0_16, %c35] : memref<1x4x360xf32, #tpu.memory_space<vmem>>, vector<1x4x288xf32>
    %20 = vector.shape_cast %19 : vector<1x4x288xf32> to vector<4x288xf32>
    %c3 = arith.constant 3 : index
    %c0_17 = arith.constant 0 : index
    %c0_18 = arith.constant 0 : index
    %21 = vector.load %arg2[%c3, %c0_17, %c0_18] : memref<9x16x4xf32, #tpu.memory_space<vmem>>, vector<1x16x4xf32>
    %22 = vector.shape_cast %21 : vector<1x16x4xf32> to vector<16x4xf32>
    %cst_19 = arith.constant dense<0.000000e+00> : vector<16x288xf32>
    %23 = tpu.matmul %22, %20, %cst_19 {dimension_numbers = #tpu.dot_dimension_numbers<[1], [0], [0], [1], [0, 0, 1, 1], [], []>} : vector<16x4xf32>, vector<4x288xf32>, vector<16x288xf32> -> vector<16x288xf32>
    %24 = arith.addf %18, %23 : vector<16x288xf32>
    %c0_20 = arith.constant 0 : index
    %c0_21 = arith.constant 0 : index
    %c36 = arith.constant 36 : index
    %25 = vector.load %arg1[%c0_20, %c0_21, %c36] : memref<1x4x360xf32, #tpu.memory_space<vmem>>, vector<1x4x288xf32>
    %26 = vector.shape_cast %25 : vector<1x4x288xf32> to vector<4x288xf32>
    %c4 = arith.constant 4 : index
    %c0_22 = arith.constant 0 : index
    %c0_23 = arith.constant 0 : index
    %27 = vector.load %arg2[%c4, %c0_22, %c0_23] : memref<9x16x4xf32, #tpu.memory_space<vmem>>, vector<1x16x4xf32>
    %28 = vector.shape_cast %27 : vector<1x16x4xf32> to vector<16x4xf32>
    %cst_24 = arith.constant dense<0.000000e+00> : vector<16x288xf32>
    %29 = tpu.matmul %28, %26, %cst_24 {dimension_numbers = #tpu.dot_dimension_numbers<[1], [0], [0], [1], [0, 0, 1, 1], [], []>} : vector<16x4xf32>, vector<4x288xf32>, vector<16x288xf32> -> vector<16x288xf32>
    %30 = arith.addf %24, %29 : vector<16x288xf32>
    %c0_25 = arith.constant 0 : index
    %c0_26 = arith.constant 0 : index
    %c37 = arith.constant 37 : index
    %31 = vector.load %arg1[%c0_25, %c0_26, %c37] : memref<1x4x360xf32, #tpu.memory_space<vmem>>, vector<1x4x288xf32>
    %32 = vector.shape_cast %31 : vector<1x4x288xf32> to vector<4x288xf32>
    %c5 = arith.constant 5 : index
    %c0_27 = arith.constant 0 : index
    %c0_28 = arith.constant 0 : index
    %33 = vector.load %arg2[%c5, %c0_27, %c0_28] : memref<9x16x4xf32, #tpu.memory_space<vmem>>, vector<1x16x4xf32>
    %34 = vector.shape_cast %33 : vector<1x16x4xf32> to vector<16x4xf32>
    %cst_29 = arith.constant dense<0.000000e+00> : vector<16x288xf32>
    %35 = tpu.matmul %34, %32, %cst_29 {dimension_numbers = #tpu.dot_dimension_numbers<[1], [0], [0], [1], [0, 0, 1, 1], [], []>} : vector<16x4xf32>, vector<4x288xf32>, vector<16x288xf32> -> vector<16x288xf32>
    %36 = arith.addf %30, %35 : vector<16x288xf32>
    %c0_30 = arith.constant 0 : index
    %c0_31 = arith.constant 0 : index
    %c53 = arith.constant 53 : index
    %37 = vector.load %arg1[%c0_30, %c0_31, %c53] : memref<1x4x360xf32, #tpu.memory_space<vmem>>, vector<1x4x288xf32>
    %38 = vector.shape_cast %37 : vector<1x4x288xf32> to vector<4x288xf32>
    %c6 = arith.constant 6 : index
    %c0_32 = arith.constant 0 : index
    %c0_33 = arith.constant 0 : index
    %39 = vector.load %arg2[%c6, %c0_32, %c0_33] : memref<9x16x4xf32, #tpu.memory_space<vmem>>, vector<1x16x4xf32>
    %40 = vector.shape_cast %39 : vector<1x16x4xf32> to vector<16x4xf32>
    %cst_34 = arith.constant dense<0.000000e+00> : vector<16x288xf32>
    %41 = tpu.matmul %40, %38, %cst_34 {dimension_numbers = #tpu.dot_dimension_numbers<[1], [0], [0], [1], [0, 0, 1, 1], [], []>} : vector<16x4xf32>, vector<4x288xf32>, vector<16x288xf32> -> vector<16x288xf32>
    %42 = arith.addf %36, %41 : vector<16x288xf32>
    %c0_35 = arith.constant 0 : index
    %c0_36 = arith.constant 0 : index
    %c54 = arith.constant 54 : index
    %43 = vector.load %arg1[%c0_35, %c0_36, %c54] : memref<1x4x360xf32, #tpu.memory_space<vmem>>, vector<1x4x288xf32>
    %44 = vector.shape_cast %43 : vector<1x4x288xf32> to vector<4x288xf32>
    %c7 = arith.constant 7 : index
    %c0_37 = arith.constant 0 : index
    %c0_38 = arith.constant 0 : index
    %45 = vector.load %arg2[%c7, %c0_37, %c0_38] : memref<9x16x4xf32, #tpu.memory_space<vmem>>, vector<1x16x4xf32>
    %46 = vector.shape_cast %45 : vector<1x16x4xf32> to vector<16x4xf32>
    %cst_39 = arith.constant dense<0.000000e+00> : vector<16x288xf32>
    %47 = tpu.matmul %46, %44, %cst_39 {dimension_numbers = #tpu.dot_dimension_numbers<[1], [0], [0], [1], [0, 0, 1, 1], [], []>} : vector<16x4xf32>, vector<4x288xf32>, vector<16x288xf32> -> vector<16x288xf32>
    %48 = arith.addf %42, %47 : vector<16x288xf32>
    %c0_40 = arith.constant 0 : index
    %c0_41 = arith.constant 0 : index
    %c55 = arith.constant 55 : index
    %49 = vector.load %arg1[%c0_40, %c0_41, %c55] : memref<1x4x360xf32, #tpu.memory_space<vmem>>, vector<1x4x288xf32>
    %50 = vector.shape_cast %49 : vector<1x4x288xf32> to vector<4x288xf32>
    %c8 = arith.constant 8 : index
    %c0_42 = arith.constant 0 : index
    %c0_43 = arith.constant 0 : index
    %51 = vector.load %arg2[%c8, %c0_42, %c0_43] : memref<9x16x4xf32, #tpu.memory_space<vmem>>, vector<1x16x4xf32>
    %52 = vector.shape_cast %51 : vector<1x16x4xf32> to vector<16x4xf32>
    %cst_44 = arith.constant dense<0.000000e+00> : vector<16x288xf32>
    %53 = tpu.matmul %52, %50, %cst_44 {dimension_numbers = #tpu.dot_dimension_numbers<[1], [0], [0], [1], [0, 0, 1, 1], [], []>} : vector<16x4xf32>, vector<4x288xf32>, vector<16x288xf32> -> vector<16x288xf32>
    %54 = arith.addf %48, %53 : vector<16x288xf32>
    %c0_45 = arith.constant 0 : index
    %c0_46 = arith.constant 0 : index
    %55 = vector.load %arg3[%c0_45, %c0_46] : memref<16x1xf32, #tpu.memory_space<vmem>>, vector<16x1xf32>
    %56 = vector.broadcast %55 : vector<16x1xf32> to vector<16x288xf32>
    %57 = arith.addf %54, %56 : vector<16x288xf32>
    %c0_47 = arith.constant 0 : index
    %c0_48 = arith.constant 0 : index
    %c0_49 = arith.constant 0 : index
    %58 = vector.load %arg4[%c0_47, %c0_48, %c0_49] : memref<1x16x288xf32, #tpu.memory_space<vmem>>, vector<1x16x288xf32>
    %59 = vector.shape_cast %58 : vector<1x16x288xf32> to vector<16x288xf32>
    %60 = vector.shape_cast %57 : vector<16x288xf32> to vector<1x16x288xf32>
    tpu.vector_store %arg4[%c0_47, %c0_48, %c0_49], %60 {strides = array<i32>} : memref<1x16x288xf32, #tpu.memory_space<vmem>>, vector<1x16x288xf32>,
    return
  }
  func.func @transform_0(%arg0: i32) -> (i32, i32, i32) {
    %c0_i32 = arith.constant 0 : i32
    %c0_i32_0 = arith.constant 0 : i32
    %c0_i32_1 = arith.constant 0 : i32
    return %arg0, %c0_i32, %c0_i32_0 : i32, i32, i32
  }
  func.func @transform_1(%arg0: i32) -> (i32, i32, i32) {
    %c0_i32 = arith.constant 0 : i32
    %c0_i32_0 = arith.constant 0 : i32
    %c0_i32_1 = arith.constant 0 : i32
    %c0_i32_2 = arith.constant 0 : i32
    return %c0_i32, %c0_i32_0, %c0_i32_1 : i32, i32, i32
  }
  func.func @transform_2(%arg0: i32) -> (i32, i32) {
    %c0_i32 = arith.constant 0 : i32
    %c0_i32_0 = arith.constant 0 : i32
    %c0_i32_1 = arith.constant 0 : i32
    return %c0_i32, %c0_i32_0 : i32, i32
  }
  func.func @transform_3(%arg0: i32) -> (i32, i32, i32) {
    %c0_i32 = arith.constant 0 : i32
    %c0_i32_0 = arith.constant 0 : i32
    %c0_i32_1 = arith.constant 0 : i32
    return %arg0, %c0_i32, %c0_i32_0 : i32, i32, i32
  }
}

</mosaic_0001>

<llo_original>
// kernel: tpu_custom_call.1
$region0: #{tpu_custom_call.1}
  #allocation0 [shape = 'u32[]', space=smem, size = 0x4, offset = 0x4, fixed_abs, tag = 'smem constant byte address 0x4 - core index']
  #allocation1 [shape = 'u32[144,128]{1,0:T(1,128)}', space=vmem, size = 0x12000, scoped, tag = 'internal scratch']
  %s0 = inlined_call_operand.vmem [shape: f32[2,4,360], index: 0, kind: input, shape index: {}]
  %s1 = inlined_call_operand.vmem [shape: f32[9,16,4], index: 1, kind: input, shape index: {}]
  %s2 = inlined_call_operand.vmem [shape: f32[16,1], index: 2, kind: input, shape index: {}]
  %s3 = inlined_call_operand.hbm [shape: f32[2,16,288], index: 3, kind: output, shape index: {}]
  %s4 = sld [smem:[#allocation0]]
  $region45: #{tpu_custom_call.1} parent=0
    _
  %s6 = ssub.s32 1, %s4
  %s7 = scalar_select 0, %s6, %s4
  $region1: #{tpu_custom_call.1} parent=0
    #allocation2 [shape = 'u8[49152]{0}', space=vmem, size = 0xc000, scoped, tag = 'output window, operand 0']
    #allocation3 [shape = 's32[2]{0}', space=sflag, size = 0x8, scoped, tag = 'scoped memory for tpu_custom_call.1']
    %8 = vsyncpa [#allocation3], 0
    %s9 = scalar_lea.sflag [#allocation3], 1
    %10 = vsyncpa %s9, 0
    loop: start=0, step=1, limit=4
    $region2: #{tpu_custom_call.1} parent=1 // loop_pre_header
      _
    $region3: #{tpu_custom_call.1} parent=1 // loop_header
      %s12 = sphi 0, %s16
      %p13 = scmp.ge.s32.totalorder %s12, 4
      %s22 = sphi 0, %s24
      %s25 = sphi 0, %s22
      %s26 = sphi 0, %s25
      %s42 = sphi 0, %s26
      %s46 = sphi 0, %s46
      %s48 = sphi 0, %s46
      %s49 = sphi 0, %s48
      %s63 = sphi 0, %s49
      %s67 = sphi 0, %s67
      %s69 = sphi 0, %s67
      %s70 = sphi 0, %s69
      %s84 = sphi 0, %s70
      %s90 = sphi 0, %s92
      %s93 = sphi 0, %s90
      %s94 = sphi 0, %s93
      %s110 = sphi 0, %s94
    $region4: #{tpu_custom_call.1} parent=1 // loop_header_branch
      %15 = sbr.rel (%p13) target = $region8
    $region5: #{tpu_custom_call.1} parent=1 // loop_body
      %s17 = ssub.s32 %s12, 1
      %s18 = ssub.s32 %s12, 2
      %s19 = sadd.s32 %s12, 1
      %s20 = ssub.s32 %s12, %s19
      %p21 = scmp.eq.s32.totalorder %s20, 0
      %s23 = sadd.s32 %s22, 1
      %s24 = scalar_select %p21, %s22, %s23
      %p27 = pneg %p21
      %p28 = scmp.eq.s32.totalorder %s12, 1
      %p29 = por %p27, %p28
      %p30 = scmp.ne.s32.totalorder %s22, %s25
      %p31 = scmp.eq.s32.totalorder %s12, 0
      %p32 = por %p30, %p31
      %p33 = scmp.ne.s32.totalorder %s22, %s25
      %p34 = scmp.eq.s32.totalorder %s17, 1
      %p35 = por %p33, %p34
      %p36 = scmp.ne.s32.totalorder %s25, %s26
      %p37 = scmp.eq.s32.totalorder %s17, 0
      %p38 = por %p36, %p37
      %p39 = scmp.ne.s32.totalorder %s25, %s26
      %p40 = scmp.eq.s32.totalorder %s18, 1
      %p41 = por %p39, %p40
      %p43 = scmp.ne.s32.totalorder %s26, %s42
      %p44 = scmp.eq.s32.totalorder %s18, 0
      %p45 = por %p43, %p44
      %s47 = sadd.s32 %s46, 1
      %p50 = scmp.eq.s32.totalorder %s12, 1
      %p51 = scmp.ne.s32.totalorder %s46, %s48
      %p52 = scmp.eq.s32.totalorder %s12, 0
      %p53 = por %p51, %p52
      %p54 = scmp.ne.s32.totalorder %s46, %s48
      %p55 = scmp.eq.s32.totalorder %s17, 1
      %p56 = por %p54, %p55
      %p57 = scmp.ne.s32.totalorder %s48, %s49
      %p58 = scmp.eq.s32.totalorder %s17, 0
      %p59 = por %p57, %p58
      %p60 = scmp.ne.s32.totalorder %s48, %s49
      %p61 = scmp.eq.s32.totalorder %s18, 1
      %p62 = por %p60, %p61
      %p64 = scmp.ne.s32.totalorder %s49, %s63
      %p65 = scmp.eq.s32.totalorder %s18, 0
      %p66 = por %p64, %p65
      %s68 = sadd.s32 %s67, 1
      %p71 = scmp.eq.s32.totalorder %s12, 1
      %p72 = scmp.ne.s32.totalorder %s67, %s69
      %p73 = scmp.eq.s32.totalorder %s12, 0
      %p74 = por %p72, %p73
      %p75 = scmp.ne.s32.totalorder %s67, %s69
      %p76 = scmp.eq.s32.totalorder %s17, 1
      %p77 = por %p75, %p76
      %p78 = scmp.ne.s32.totalorder %s69, %s70
      %p79 = scmp.eq.s32.totalorder %s17, 0
      %p80 = por %p78, %p79
      %p81 = scmp.ne.s32.totalorder %s69, %s70
      %p82 = scmp.eq.s32.totalorder %s18, 1
      %p83 = por %p81, %p82
      %p85 = scmp.ne.s32.totalorder %s70, %s84
      %p86 = scmp.eq.s32.totalorder %s18, 0
      %p87 = por %p85, %p86
      %s88 = ssub.s32 %s12, %s19
      %p89 = scmp.eq.s32.totalorder %s88, 0
      %s91 = sadd.s32 %s90, 1
      %s92 = scalar_select %p89, %s90, %s91
      %p95 = pneg %p89
      %p96 = scmp.eq.s32.totalorder %s12, 1
      %p97 = por %p95, %p96
      %p98 = scmp.ne.s32.totalorder %s90, %s93
      %p99 = scmp.eq.s32.totalorder %s12, 0
      %p100 = por %p98, %p99
      %p101 = scmp.ne.s32.totalorder %s90, %s93
      %p102 = scmp.eq.s32.totalorder %s17, 1
      %p103 = por %p101, %p102
      %p104 = scmp.ne.s32.totalorder %s93, %s94
      %p105 = scmp.eq.s32.totalorder %s17, 0
      %p106 = por %p104, %p105
      %p107 = scmp.ne.s32.totalorder %s93, %s94
      %p108 = scmp.eq.s32.totalorder %s18, 1
      %p109 = por %p107, %p108
      %p111 = scmp.ne.s32.totalorder %s94, %s110
      %p112 = scmp.eq.s32.totalorder %s18, 0
      %p113 = por %p111, %p112
      %p114 = scmp.le.s32.totalorder 1, %s12
      %p115 = scmp.lt.s32.totalorder %s12, 3
      %p116 = pnand %p114, %p115
      %p117 = pneg %p116
      // Predicated region
      $region9: #{tpu_custom_call.1} parent=5 // pred_check
        _
      $region10: #{tpu_custom_call.1} parent=5 // pred_check_branch
        %119 = sbr.rel (%p116) target = $region12
      $region11: #{tpu_custom_call.1} parent=5 // pred_region
        %s120 = ssub.s32 %s12, 1
        // Predicated region
        $region13: #{tpu_custom_call.1} parent=11 // pred_check
          %p121 = pneg %p59
        $region14: #{tpu_custom_call.1} parent=11 // pred_check_branch
          %123 = sbr.rel (%p121) target = $region16
        $region15: #{tpu_custom_call.1} parent=11 // pred_region
          _
        $region16: #{tpu_custom_call.1} parent=11 // pred_fallthru
          _
        // Predicated region
        $region17: #{tpu_custom_call.1} parent=11 // pred_check
          %p124 = pneg %p80
        $region18: #{tpu_custom_call.1} parent=11 // pred_check_branch
          %126 = sbr.rel (%p124) target = $region20
        $region19: #{tpu_custom_call.1} parent=11 // pred_region
          _
        $region20: #{tpu_custom_call.1} parent=11 // pred_fallthru
          _
      $region12: #{tpu_custom_call.1} parent=5 // pred_fallthru
        _
      %p127 = scmp.lt.s32.totalorder %s12, 2
      // Predicated region
      $region21: #{tpu_custom_call.1} parent=5 // pred_check
        %p128 = pneg %p127
      $region22: #{tpu_custom_call.1} parent=5 // pred_check_branch
        %130 = sbr.rel (%p128) target = $region24
      $region23: #{tpu_custom_call.1} parent=5 // pred_region
        // Predicated region
        $region25: #{tpu_custom_call.1} parent=23 // pred_check
          %p131 = pneg %p32
        $region26: #{tpu_custom_call.1} parent=23 // pred_check_branch
          %133 = sbr.rel (%p131) target = $region28
        $region27: #{tpu_custom_call.1} parent=23 // pred_region
          %p134 = scmp.lt.s32.totalorder %s12, 1
          %s135 = scalar_select %p134, %s12, 1
          %s136 = smul.addr %s135, 3
          %s137 = smul.addr %s136, 4
          %s138 = scalar_lea.vmem %s0, %s137
        $region28: #{tpu_custom_call.1} parent=23 // pred_fallthru
          _
      $region24: #{tpu_custom_call.1} parent=5 // pred_fallthru
        _
      %p139 = scmp.le.s32.totalorder 1, %s12
      %p140 = scmp.lt.s32.totalorder %s12, 3
      %p141 = pnand %p139, %p140
      %p142 = pneg %p141
      // Predicated region
      $region29: #{tpu_custom_call.1} parent=5 // pred_check
        _
      $region30: #{tpu_custom_call.1} parent=5 // pred_check_branch
        %144 = sbr.rel (%p141) target = $region32
      $region31: #{tpu_custom_call.1} parent=5 // pred_region
        %s145 = ssub.s32 %s12, 1
        %p146 = scmp.lt.s32.totalorder %s17, 1
        %s147 = scalar_select %p146, %s17, 1
        %s148 = smul.addr %s147, 3
        %s149 = smul.addr %s148, 4
        %s150 = scalar_lea.vmem %s0, %s149
        %p151 = pneg %p38
        %p152 = pneg %p35
        %p153 = pneg %p59
        %p154 = pneg %p56
        %p155 = pneg %p80
        %p156 = pneg %p77
        %p157 = pneg %p106
        %p158 = pneg %p103
        %s159 = sand.u32 %s93, 1
        %s160 = scalar_lea.sflag [#allocation3], %s159
        %s161 = sand.u32 %s93, 1
        %s162 = smul.addr %s161, 48
        %s163 = scalar_lea.vmem [#allocation2], %s162
        %p164 = scmp.lt.s32.totalorder %s17, 1
        %s165 = scalar_select %p164, %s17, 1
        %s166 = smul.addr %s165, 3
        %s167 = smul.addr %s166, 4
        %s168 = scalar_lea.vmem %s0, %s167
        %v169 = vld [vmem:[%s168] sm:$0xff]
        %v170 = vld [vmem:[%s168 + $0x8] sm:$0xf]
        %v171 = vld [vmem:[%s1] sm:$0xff]
        %v172 = vld [vmem:[%s1 + $0x8] sm:$0xff]
        %s173 = scalar_lea.vmem %s1, 16
        %v174 = vld [vmem:[%s173] sm:$0xff]
        %v175 = vld [vmem:[%s173 + $0x8] sm:$0xff]
        %v178 = vcombine.high %v169, %v169
        %179 = vrot.lane.b32.xlu0 %v169, 110
        %v180 = vpop.permute.xlu0 %179
        %181 = vrot.lane.b32.xlu0 %v178, 110
        %v182 = vpop.permute.xlu0 %181
        %183 = vrot.lane.b32.xlu0 %v170, 110
        %v184 = vpop.permute.xlu0 %183
        %vm185 = vcmask 900096
        %v186 = vsel %vm185, %v180, %v182
        %v187 = vsel %vm185, %v182, %v184
        %vm188 = vcmask 31744
        %v190 = vsel %vm188, %v174, 0
        %v193 = vsel %vm188, %v175, 0
        %vm195 = vcmask 1043456
        %v196 = vsel %vm195, %v186, 0
        %v198 = vsel %vm195, %v187, 0
        %v200 = vsel %vm195, %v184, 0
        %202 = vmatprep.subr.mxu0 0.0
        %203 = vmatpush1.msra.mxu0 0.0
        %204 = vmatprep.subr.mxu0 0.0
        %205 = vmatpush1.msra.mxu0 0.0
        %206 = vmatprep.subr.mxu0 0.0
        %207 = vmatpush1.msra.mxu0 0.0
        %208 = vmatprep.subr.mxu0 0.0
        %209 = vmatpush1.msra.mxu0 0.0
        %210 = vmatprep.subr.mxu0 0.0
        %211 = vmatpush1.msra.mxu0 0.0
        %212 = vmatprep.subr.mxu0 0.0
        %213 = vmatpush1.msra.mxu0 0.0
        %214 = vmatprep.subr.mxu0 0.0
        %215 = vmatpush1.msra.mxu0 0.0
        %216 = vmatprep.subr.mxu0 0.0
        %217 = vmatpush1.msra.mxu0 0.0
        %218 = vmatprep.subr.mxu0 0.0
        %219 = vmatpush1.msra.mxu0 0.0
        %220 = vmatprep.subr.mxu0 0.0
        %221 = vmatpush1.msra.mxu0 0.0
        %222 = vmatprep.subr.mxu0 0.0
        %223 = vmatpush1.msra.mxu0 0.0
        %224 = vmatprep.subr.mxu0 0.0
        %225 = vmatpush1.msra.mxu0 0.0
        %226 = vmatprep.subr.mxu0 0.0
        %227 = vmatpush1.msra.mxu0 0.0
        %228 = vmatprep.subr.mxu0 0.0
        %229 = vmatpush1.msra.mxu0 0.0
        %230 = vmatprep.subr.mxu0 0.0
        %231 = vmatpush1.msra.mxu0 0.0
        %232 = vmatprep.subr.mxu0 %v198
        %233 = vmatpush1.msra.mxu0 %v196
        %234 = vmatprep.subr.mxu0 0.0
        %235 = vmatpush2.msra.mxu0 0.0
        %236 = vmatprep.subr.mxu0 0.0
        %237 = vmatpush2.msra.mxu0 0.0
        %238 = vmatprep.subr.mxu0 0.0
        %239 = vmatpush2.msra.mxu0 0.0
        %240 = vmatprep.subr.mxu0 0.0
        %241 = vmatpush2.msra.mxu0 0.0
        %242 = vmatprep.subr.mxu0 0.0
        %243 = vmatpush2.msra.mxu0 0.0
        %244 = vmatprep.subr.mxu0 0.0
        %245 = vmatpush2.msra.mxu0 0.0
        %246 = vmatprep.subr.mxu0 0.0
        %247 = vmatpush2.msra.mxu0 0.0
        %248 = vmatprep.subr.mxu0 0.0
        %249 = vmatpush2.msra.mxu0 0.0
        %250 = vmatprep.subr.mxu0 0.0
        %251 = vmatpush2.msra.mxu0 0.0
        %252 = vmatprep.subr.mxu0 0.0
        %253 = vmatpush2.msra.mxu0 0.0
        %254 = vmatprep.subr.mxu0 0.0
        %255 = vmatpush2.msra.mxu0 0.0
        %256 = vmatprep.subr.mxu0 0.0
        %257 = vmatpush2.msra.mxu0 0.0
        %258 = vmatprep.subr.mxu0 0.0
        %259 = vmatpush2.msra.mxu0 0.0
        %260 = vmatprep.subr.mxu0 0.0
        %261 = vmatpush2.msra.mxu0 0.0
        %262 = vmatprep.subr.mxu0 0.0
        %263 = vmatpush2.msra.mxu0 0.0
        %264 = vmatprep.subr.mxu0 0.0
        %265 = vmatpush2.msra.mxu0 0.0
        %266 = vmatprep.mubr.f32.mxu0 0.0
        %267 = vmatmul.mubr.f32.gmra.mxu0 %v190
        %v268 = vpop.f32.mrf.mxu0
        %v269 = vadd.f32 0.0, %v268
        %v270 = vpop.f32.mrf.mxu0
        %v271 = vadd.f32 0.0, %v270
        %272 = vmatprep.mubr.f32.mxu0 0.0
        %273 = vmatmul.mubr.f32.gmra.mxu0 %v193
        %v274 = vpop.f32.mrf.mxu0
        %v275 = vadd.f32 0.0, %v274
        %v276 = vpop.f32.mrf.mxu0
        %v277 = vadd.f32 0.0, %v276
        %278 = vdwg.mxu0
        %279 = vmatprep.subr.mxu0 0.0
        %280 = vmatpush1.msra.mxu0 0.0
        %281 = vmatprep.subr.mxu0 0.0
        %282 = vmatpush1.msra.mxu0 0.0
        %283 = vmatprep.subr.mxu0 0.0
        %284 = vmatpush1.msra.mxu0 0.0
        %285 = vmatprep.subr.mxu0 0.0
        %286 = vmatpush1.msra.mxu0 0.0
        %287 = vmatprep.subr.mxu0 0.0
        %288 = vmatpush1.msra.mxu0 0.0
        %289 = vmatprep.subr.mxu0 0.0
        %290 = vmatpush1.msra.mxu0 0.0
        %291 = vmatprep.subr.mxu0 0.0
        %292 = vmatpush1.msra.mxu0 0.0
        %293 = vmatprep.subr.mxu0 0.0
        %294 = vmatpush1.msra.mxu0 0.0
        %295 = vmatprep.subr.mxu0 0.0
        %296 = vmatpush1.msra.mxu0 0.0
        %297 = vmatprep.subr.mxu0 0.0
        %298 = vmatpush1.msra.mxu0 0.0
        %299 = vmatprep.subr.mxu0 0.0
        %300 = vmatpush1.msra.mxu0 0.0
        %301 = vmatprep.subr.mxu0 0.0
        %302 = vmatpush1.msra.mxu0 0.0
        %303 = vmatprep.subr.mxu0 0.0
        %304 = vmatpush1.msra.mxu0 0.0
        %305 = vmatprep.subr.mxu0 0.0
        %306 = vmatpush1.msra.mxu0 0.0
        %307 = vmatprep.subr.mxu0 0.0
        %308 = vmatpush1.msra.mxu0 0.0
        %309 = vmatprep.subr.mxu0 0.0
        %310 = vmatpush1.msra.mxu0 %v200
        %311 = vmatprep.subr.mxu0 0.0
        %312 = vmatpush2.msra.mxu0 0.0
        %313 = vmatprep.subr.mxu0 0.0
        %314 = vmatpush2.msra.mxu0 0.0
        %315 = vmatprep.subr.mxu0 0.0
        %316 = vmatpush2.msra.mxu0 0.0
        %317 = vmatprep.subr.mxu0 0.0
        %318 = vmatpush2.msra.mxu0 0.0
        %319 = vmatprep.subr.mxu0 0.0
        %320 = vmatpush2.msra.mxu0 0.0
        %321 = vmatprep.subr.mxu0 0.0
        %322 = vmatpush2.msra.mxu0 0.0
        %323 = vmatprep.subr.mxu0 0.0
        %324 = vmatpush2.msra.mxu0 0.0
        %325 = vmatprep.subr.mxu0 0.0
        %326 = vmatpush2.msra.mxu0 0.0
        %327 = vmatprep.subr.mxu0 0.0
        %328 = vmatpush2.msra.mxu0 0.0
        %329 = vmatprep.subr.mxu0 0.0
        %330 = vmatpush2.msra.mxu0 0.0
        %331 = vmatprep.subr.mxu0 0.0
        %332 = vmatpush2.msra.mxu0 0.0
        %333 = vmatprep.subr.mxu0 0.0
        %334 = vmatpush2.msra.mxu0 0.0
        %335 = vmatprep.subr.mxu0 0.0
        %336 = vmatpush2.msra.mxu0 0.0
        %337 = vmatprep.subr.mxu0 0.0
        %338 = vmatpush2.msra.mxu0 0.0
        %339 = vmatprep.subr.mxu0 0.0
        %340 = vmatpush2.msra.mxu0 0.0
        %341 = vmatprep.subr.mxu0 0.0
        %342 = vmatpush2.msra.mxu0 0.0
        %343 = vmatprep.mubr.f32.mxu0 0.0
        %344 = vmatmul.mubr.f32.gmra.mxu0 %v190
        %v345 = vpop.f32.mrf.mxu0
        %v346 = vadd.f32 0.0, %v345
        %v347 = vpop.f32.mrf.mxu0
        %348 = vmatprep.mubr.f32.mxu0 0.0
        %349 = vmatmul.mubr.f32.gmra.mxu0 %v193
        %v350 = vpop.f32.mrf.mxu0
        %v351 = vadd.f32 0.0, %v350
        %v352 = vpop.f32.mrf.mxu0
        %353 = vdwg.mxu0
        %354 = vrot.lane.b32.xlu0 %v169, 111
        %v355 = vpop.permute.xlu0 %354
        %356 = vrot.lane.b32.xlu0 %v178, 111
        %v357 = vpop.permute.xlu0 %356
        %358 = vrot.lane.b32.xlu0 %v170, 111
        %v359 = vpop.permute.xlu0 %358
        %vm360 = vcmask 908288
        %v361 = vsel %vm360, %v355, %v357
        %v362 = vsel %vm360, %v357, %v359
        %v364 = vsel %vm188, %v171, 0
        %v367 = vsel %vm188, %v172, 0
        %v369 = vsel %vm195, %v361, 0
        %v371 = vsel %vm195, %v362, 0
        %v373 = vsel %vm195, %v359, 0
        %375 = vmatprep.subr.mxu0 0.0
        %376 = vmatpush1.msra.mxu0 0.0
        %377 = vmatprep.subr.mxu0 0.0
        %378 = vmatpush1.msra.mxu0 0.0
        %379 = vmatprep.subr.mxu0 0.0
        %380 = vmatpush1.msra.mxu0 0.0
        %381 = vmatprep.subr.mxu0 0.0
        %382 = vmatpush1.msra.mxu0 0.0
        %383 = vmatprep.subr.mxu0 0.0
        %384 = vmatpush1.msra.mxu0 0.0
        %385 = vmatprep.subr.mxu0 0.0
        %386 = vmatpush1.msra.mxu0 0.0
        %387 = vmatprep.subr.mxu0 0.0
        %388 = vmatpush1.msra.mxu0 0.0
        %389 = vmatprep.subr.mxu0 0.0
        %390 = vmatpush1.msra.mxu0 0.0
        %391 = vmatprep.subr.mxu0 0.0
        %392 = vmatpush1.msra.mxu0 0.0
        %393 = vmatprep.subr.mxu0 0.0
        %394 = vmatpush1.msra.mxu0 0.0
        %395 = vmatprep.subr.mxu0 0.0
        %396 = vmatpush1.msra.mxu0 0.0
        %397 = vmatprep.subr.mxu0 0.0
        %398 = vmatpush1.msra.mxu0 0.0
        %399 = vmatprep.subr.mxu0 0.0
        %400 = vmatpush1.msra.mxu0 0.0
        %401 = vmatprep.subr.mxu0 0.0
        %402 = vmatpush1.msra.mxu0 0.0
        %403 = vmatprep.subr.mxu0 0.0
        %404 = vmatpush1.msra.mxu0 0.0
        %405 = vmatprep.subr.mxu0 %v371
        %406 = vmatpush1.msra.mxu0 %v369
        %407 = vmatprep.subr.mxu0 0.0
        %408 = vmatpush2.msra.mxu0 0.0
        %409 = vmatprep.subr.mxu0 0.0
        %410 = vmatpush2.msra.mxu0 0.0
        %411 = vmatprep.subr.mxu0 0.0
        %412 = vmatpush2.msra.mxu0 0.0
        %413 = vmatprep.subr.mxu0 0.0
        %414 = vmatpush2.msra.mxu0 0.0
        %415 = vmatprep.subr.mxu0 0.0
        %416 = vmatpush2.msra.mxu0 0.0
        %417 = vmatprep.subr.mxu0 0.0
        %418 = vmatpush2.msra.mxu0 0.0
        %419 = vmatprep.subr.mxu0 0.0
        %420 = vmatpush2.msra.mxu0 0.0
        %421 = vmatprep.subr.mxu0 0.0
        %422 = vmatpush2.msra.mxu0 0.0
        %423 = vmatprep.subr.mxu0 0.0
        %424 = vmatpush2.msra.mxu0 0.0
        %425 = vmatprep.subr.mxu0 0.0
        %426 = vmatpush2.msra.mxu0 0.0
        %427 = vmatprep.subr.mxu0 0.0
        %428 = vmatpush2.msra.mxu0 0.0
        %429 = vmatprep.subr.mxu0 0.0
        %430 = vmatpush2.msra.mxu0 0.0
        %431 = vmatprep.subr.mxu0 0.0
        %432 = vmatpush2.msra.mxu0 0.0
        %433 = vmatprep.subr.mxu0 0.0
        %434 = vmatpush2.msra.mxu0 0.0
        %435 = vmatprep.subr.mxu0 0.0
        %436 = vmatpush2.msra.mxu0 0.0
        %437 = vmatprep.subr.mxu0 0.0
        %438 = vmatpush2.msra.mxu0 0.0
        %439 = vmatprep.mubr.f32.mxu0 0.0
        %440 = vmatmul.mubr.f32.gmra.mxu0 %v364
        %v441 = vpop.f32.mrf.mxu0
        %v442 = vadd.f32 %v269, %v441
        %v443 = vpop.f32.mrf.mxu0
        %v444 = vadd.f32 %v271, %v443
        %445 = vmatprep.mubr.f32.mxu0 0.0
        %446 = vmatmul.mubr.f32.gmra.mxu0 %v367
        %v447 = vpop.f32.mrf.mxu0
        %v448 = vadd.f32 %v275, %v447
        %v449 = vpop.f32.mrf.mxu0
        %v450 = vadd.f32 %v277, %v449
        %451 = vdwg.mxu0
        %452 = vmatprep.subr.mxu0 0.0
        %453 = vmatpush1.msra.mxu0 0.0
        %454 = vmatprep.subr.mxu0 0.0
        %455 = vmatpush1.msra.mxu0 0.0
        %456 = vmatprep.subr.mxu0 0.0
        %457 = vmatpush1.msra.mxu0 0.0
        %458 = vmatprep.subr.mxu0 0.0
        %459 = vmatpush1.msra.mxu0 0.0
        %460 = vmatprep.subr.mxu0 0.0
        %461 = vmatpush1.msra.mxu0 0.0
        %462 = vmatprep.subr.mxu0 0.0
        %463 = vmatpush1.msra.mxu0 0.0
        %464 = vmatprep.subr.mxu0 0.0
        %465 = vmatpush1.msra.mxu0 0.0
        %466 = vmatprep.subr.mxu0 0.0
        %467 = vmatpush1.msra.mxu0 0.0
        %468 = vmatprep.subr.mxu0 0.0
        %469 = vmatpush1.msra.mxu0 0.0
        %470 = vmatprep.subr.mxu0 0.0
        %471 = vmatpush1.msra.mxu0 0.0
        %472 = vmatprep.subr.mxu0 0.0
        %473 = vmatpush1.msra.mxu0 0.0
        %474 = vmatprep.subr.mxu0 0.0
        %475 = vmatpush1.msra.mxu0 0.0
        %476 = vmatprep.subr.mxu0 0.0
        %477 = vmatpush1.msra.mxu0 0.0
        %478 = vmatprep.subr.mxu0 0.0
        %479 = vmatpush1.msra.mxu0 0.0
        %480 = vmatprep.subr.mxu0 0.0
        %481 = vmatpush1.msra.mxu0 0.0
        %482 = vmatprep.subr.mxu0 0.0
        %483 = vmatpush1.msra.mxu0 %v373
        %484 = vmatprep.subr.mxu0 0.0
        %485 = vmatpush2.msra.mxu0 0.0
        %486 = vmatprep.subr.mxu0 0.0
        %487 = vmatpush2.msra.mxu0 0.0
        %488 = vmatprep.subr.mxu0 0.0
        %489 = vmatpush2.msra.mxu0 0.0
        %490 = vmatprep.subr.mxu0 0.0
        %491 = vmatpush2.msra.mxu0 0.0
        %492 = vmatprep.subr.mxu0 0.0
        %493 = vmatpush2.msra.mxu0 0.0
        %494 = vmatprep.subr.mxu0 0.0
        %495 = vmatpush2.msra.mxu0 0.0
        %496 = vmatprep.subr.mxu0 0.0
        %497 = vmatpush2.msra.mxu0 0.0
        %498 = vmatprep.subr.mxu0 0.0
        %499 = vmatpush2.msra.mxu0 0.0
        %500 = vmatprep.subr.mxu0 0.0
        %501 = vmatpush2.msra.mxu0 0.0
        %502 = vmatprep.subr.mxu0 0.0
        %503 = vmatpush2.msra.mxu0 0.0
        %504 = vmatprep.subr.mxu0 0.0
        %505 = vmatpush2.msra.mxu0 0.0
        %506 = vmatprep.subr.mxu0 0.0
        %507 = vmatpush2.msra.mxu0 0.0
        %508 = vmatprep.subr.mxu0 0.0
        %509 = vmatpush2.msra.mxu0 0.0
        %510 = vmatprep.subr.mxu0 0.0
        %511 = vmatpush2.msra.mxu0 0.0
        %512 = vmatprep.subr.mxu0 0.0
        %513 = vmatpush2.msra.mxu0 0.0
        %514 = vmatprep.subr.mxu0 0.0
        %515 = vmatpush2.msra.mxu0 0.0
        %516 = vmatprep.mubr.f32.mxu0 0.0
        %517 = vmatmul.mubr.f32.gmra.mxu0 %v364
        %v518 = vpop.f32.mrf.mxu0
        %v519 = vadd.f32 %v346, %v518
        %v520 = vpop.f32.mrf.mxu0
        %521 = vmatprep.mubr.f32.mxu0 0.0
        %522 = vmatmul.mubr.f32.gmra.mxu0 %v367
        %v523 = vpop.f32.mrf.mxu0
        %v524 = vadd.f32 %v351, %v523
        %v525 = vpop.f32.mrf.mxu0
        %526 = vdwg.mxu0
        %v527 = vld [vmem:[%s168] sm:$0xff]
        %v528 = vld [vmem:[%s168 + $0x8] sm:$0xf]
        %s529 = scalar_lea.vmem %s1, 32
        %v530 = vld [vmem:[%s529] sm:$0xff]
        %v531 = vld [vmem:[%s529 + $0x8] sm:$0xff]
        %v534 = vcombine.high %v527, %v527
        %535 = vrot.lane.b32.xlu0 %v527, 109
        %v536 = vpop.permute.xlu0 %535
        %537 = vrot.lane.b32.xlu0 %v534, 109
        %v538 = vpop.permute.xlu0 %537
        %539 = vrot.lane.b32.xlu0 %v528, 109
        %v540 = vpop.permute.xlu0 %539
        %vm541 = vcmask 891904
        %v542 = vsel %vm541, %v536, %v538
        %v543 = vsel %vm541, %v538, %v540
        %v545 = vsel %vm188, %v530, 0
        %v548 = vsel %vm188, %v531, 0
        %v550 = vsel %vm195, %v542, 0
        %v552 = vsel %vm195, %v543, 0
        %v554 = vsel %vm195, %v540, 0
        %556 = vmatprep.subr.mxu0 0.0
        %557 = vmatpush1.msra.mxu0 0.0
        %558 = vmatprep.subr.mxu0 0.0
        %559 = vmatpush1.msra.mxu0 0.0
        %560 = vmatprep.subr.mxu0 0.0
        %561 = vmatpush1.msra.mxu0 0.0
        %562 = vmatprep.subr.mxu0 0.0
        %563 = vmatpush1.msra.mxu0 0.0
        %564 = vmatprep.subr.mxu0 0.0
        %565 = vmatpush1.msra.mxu0 0.0
        %566 = vmatprep.subr.mxu0 0.0
        %567 = vmatpush1.msra.mxu0 0.0
        %568 = vmatprep.subr.mxu0 0.0
        %569 = vmatpush1.msra.mxu0 0.0
        %570 = vmatprep.subr.mxu0 0.0
        %571 = vmatpush1.msra.mxu0 0.0
        %572 = vmatprep.subr.mxu0 0.0
        %573 = vmatpush1.msra.mxu0 0.0
        %574 = vmatprep.subr.mxu0 0.0
        %575 = vmatpush1.msra.mxu0 0.0
        %576 = vmatprep.subr.mxu0 0.0
        %577 = vmatpush1.msra.mxu0 0.0
        %578 = vmatprep.subr.mxu0 0.0
        %579 = vmatpush1.msra.mxu0 0.0
        %580 = vmatprep.subr.mxu0 0.0
        %581 = vmatpush1.msra.mxu0 0.0
        %582 = vmatprep.subr.mxu0 0.0
        %583 = vmatpush1.msra.mxu0 0.0
        %584 = vmatprep.subr.mxu0 0.0
        %585 = vmatpush1.msra.mxu0 0.0
        %586 = vmatprep.subr.mxu0 %v552
        %587 = vmatpush1.msra.mxu0 %v550
        %588 = vmatprep.subr.mxu0 0.0
        %589 = vmatpush2.msra.mxu0 0.0
        %590 = vmatprep.subr.mxu0 0.0
        %591 = vmatpush2.msra.mxu0 0.0
        %592 = vmatprep.subr.mxu0 0.0
        %593 = vmatpush2.msra.mxu0 0.0
        %594 = vmatprep.subr.mxu0 0.0
        %595 = vmatpush2.msra.mxu0 0.0
        %596 = vmatprep.subr.mxu0 0.0
        %597 = vmatpush2.msra.mxu0 0.0
        %598 = vmatprep.subr.mxu0 0.0
        %599 = vmatpush2.msra.mxu0 0.0
        %600 = vmatprep.subr.mxu0 0.0
        %601 = vmatpush2.msra.mxu0 0.0
        %602 = vmatprep.subr.mxu0 0.0
        %603 = vmatpush2.msra.mxu0 0.0
        %604 = vmatprep.subr.mxu0 0.0
        %605 = vmatpush2.msra.mxu0 0.0
        %606 = vmatprep.subr.mxu0 0.0
        %607 = vmatpush2.msra.mxu0 0.0
        %608 = vmatprep.subr.mxu0 0.0
        %609 = vmatpush2.msra.mxu0 0.0
        %610 = vmatprep.subr.mxu0 0.0
        %611 = vmatpush2.msra.mxu0 0.0
        %612 = vmatprep.subr.mxu0 0.0
        %613 = vmatpush2.msra.mxu0 0.0
        %614 = vmatprep.subr.mxu0 0.0
        %615 = vmatpush2.msra.mxu0 0.0
        %616 = vmatprep.subr.mxu0 0.0
        %617 = vmatpush2.msra.mxu0 0.0
        %618 = vmatprep.subr.mxu0 0.0
        %619 = vmatpush2.msra.mxu0 0.0
        %620 = vmatprep.mubr.f32.mxu0 0.0
        %621 = vmatmul.mubr.f32.gmra.mxu0 %v545
        %v622 = vpop.f32.mrf.mxu0
        %v623 = vadd.f32 0.0, %v622
        %v624 = vpop.f32.mrf.mxu0
        %v625 = vadd.f32 0.0, %v624
        %626 = vmatprep.mubr.f32.mxu0 0.0
        %627 = vmatmul.mubr.f32.gmra.mxu0 %v548
        %v628 = vpop.f32.mrf.mxu0
        %v629 = vadd.f32 0.0, %v628
        %v630 = vpop.f32.mrf.mxu0
        %v631 = vadd.f32 0.0, %v630
        %632 = vdwg.mxu0
        %633 = vmatprep.subr.mxu0 0.0
        %634 = vmatpush1.msra.mxu0 0.0
        %635 = vmatprep.subr.mxu0 0.0
        %636 = vmatpush1.msra.mxu0 0.0
        %637 = vmatprep.subr.mxu0 0.0
        %638 = vmatpush1.msra.mxu0 0.0
        %639 = vmatprep.subr.mxu0 0.0
        %640 = vmatpush1.msra.mxu0 0.0
        %641 = vmatprep.subr.mxu0 0.0
        %642 = vmatpush1.msra.mxu0 0.0
        %643 = vmatprep.subr.mxu0 0.0
        %644 = vmatpush1.msra.mxu0 0.0
        %645 = vmatprep.subr.mxu0 0.0
        %646 = vmatpush1.msra.mxu0 0.0
        %647 = vmatprep.subr.mxu0 0.0
        %648 = vmatpush1.msra.mxu0 0.0
        %649 = vmatprep.subr.mxu0 0.0
        %650 = vmatpush1.msra.mxu0 0.0
        %651 = vmatprep.subr.mxu0 0.0
        %652 = vmatpush1.msra.mxu0 0.0
        %653 = vmatprep.subr.mxu0 0.0
        %654 = vmatpush1.msra.mxu0 0.0
        %655 = vmatprep.subr.mxu0 0.0
        %656 = vmatpush1.msra.mxu0 0.0
        %657 = vmatprep.subr.mxu0 0.0
        %658 = vmatpush1.msra.mxu0 0.0
        %659 = vmatprep.subr.mxu0 0.0
        %660 = vmatpush1.msra.mxu0 0.0
        %661 = vmatprep.subr.mxu0 0.0
        %662 = vmatpush1.msra.mxu0 0.0
        %663 = vmatprep.subr.mxu0 0.0
        %664 = vmatpush1.msra.mxu0 %v554
        %665 = vmatprep.subr.mxu0 0.0
        %666 = vmatpush2.msra.mxu0 0.0
        %667 = vmatprep.subr.mxu0 0.0
        %668 = vmatpush2.msra.mxu0 0.0
        %669 = vmatprep.subr.mxu0 0.0
        %670 = vmatpush2.msra.mxu0 0.0
        %671 = vmatprep.subr.mxu0 0.0
        %672 = vmatpush2.msra.mxu0 0.0
        %673 = vmatprep.subr.mxu0 0.0
        %674 = vmatpush2.msra.mxu0 0.0
        %675 = vmatprep.subr.mxu0 0.0
        %676 = vmatpush2.msra.mxu0 0.0
        %677 = vmatprep.subr.mxu0 0.0
        %678 = vmatpush2.msra.mxu0 0.0
        %679 = vmatprep.subr.mxu0 0.0
        %680 = vmatpush2.msra.mxu0 0.0
        %681 = vmatprep.subr.mxu0 0.0
        %682 = vmatpush2.msra.mxu0 0.0
        %683 = vmatprep.subr.mxu0 0.0
        %684 = vmatpush2.msra.mxu0 0.0
        %685 = vmatprep.subr.mxu0 0.0
        %686 = vmatpush2.msra.mxu0 0.0
        %687 = vmatprep.subr.mxu0 0.0
        %688 = vmatpush2.msra.mxu0 0.0
        %689 = vmatprep.subr.mxu0 0.0
        %690 = vmatpush2.msra.mxu0 0.0
        %691 = vmatprep.subr.mxu0 0.0
        %692 = vmatpush2.msra.mxu0 0.0
        %693 = vmatprep.subr.mxu0 0.0
        %694 = vmatpush2.msra.mxu0 0.0
        %695 = vmatprep.subr.mxu0 0.0
        %696 = vmatpush2.msra.mxu0 0.0
        %697 = vmatprep.mubr.f32.mxu0 0.0
        %698 = vmatmul.mubr.f32.gmra.mxu0 %v545
        %v699 = vpop.f32.mrf.mxu0
        %v700 = vadd.f32 0.0, %v699
        %v701 = vpop.f32.mrf.mxu0
        %702 = vmatprep.mubr.f32.mxu0 0.0
        %703 = vmatmul.mubr.f32.gmra.mxu0 %v548
        %v704 = vpop.f32.mrf.mxu0
        %v705 = vadd.f32 0.0, %v704
        %v706 = vpop.f32.mrf.mxu0
        %707 = vdwg.mxu0
        %v708 = vadd.f32 %v442, %v623
        %v709 = vadd.f32 %v444, %v625
        %v710 = vadd.f32 %v519, %v700
        %v711 = vadd.f32 %v448, %v629
        %v712 = vadd.f32 %v450, %v631
        %v713 = vadd.f32 %v524, %v705
        %v714 = vld [vmem:[%s168] sm:$0xff]
        %v715 = vld [vmem:[%s168 + $0x8] sm:$0xf]
        %s716 = scalar_lea.vmem %s1, 48
        %v717 = vld [vmem:[%s716] sm:$0xff]
        %v718 = vld [vmem:[%s716 + $0x8] sm:$0xff]
        %v721 = vcombine.high %v714, %v714
        %722 = vrot.lane.b32.xlu0 %v714, 93
        %v723 = vpop.permute.xlu0 %722
        %724 = vrot.lane.b32.xlu0 %v721, 93
        %v725 = vpop.permute.xlu0 %724
        %726 = vrot.lane.b32.xlu0 %v715, 93
        %v727 = vpop.permute.xlu0 %726
        %vm728 = vcmask 760832
        %v729 = vsel %vm728, %v723, %v725
        %v730 = vsel %vm728, %v725, %v727
        %v732 = vsel %vm188, %v717, 0
        %v735 = vsel %vm188, %v718, 0
        %v737 = vsel %vm195, %v729, 0
        %v739 = vsel %vm195, %v730, 0
        %v741 = vsel %vm195, %v727, 0
        %743 = vmatprep.subr.mxu0 0.0
        %744 = vmatpush1.msra.mxu0 0.0
        %745 = vmatprep.subr.mxu0 0.0
        %746 = vmatpush1.msra.mxu0 0.0
        %747 = vmatprep.subr.mxu0 0.0
        %748 = vmatpush1.msra.mxu0 0.0
        %749 = vmatprep.subr.mxu0 0.0
        %750 = vmatpush1.msra.mxu0 0.0
        %751 = vmatprep.subr.mxu0 0.0
        %752 = vmatpush1.msra.mxu0 0.0
        %753 = vmatprep.subr.mxu0 0.0
        %754 = vmatpush1.msra.mxu0 0.0
        %755 = vmatprep.subr.mxu0 0.0
        %756 = vmatpush1.msra.mxu0 0.0
        %757 = vmatprep.subr.mxu0 0.0
        %758 = vmatpush1.msra.mxu0 0.0
        %759 = vmatprep.subr.mxu0 0.0
        %760 = vmatpush1.msra.mxu0 0.0
        %761 = vmatprep.subr.mxu0 0.0
        %762 = vmatpush1.msra.mxu0 0.0
        %763 = vmatprep.subr.mxu0 0.0
        %764 = vmatpush1.msra.mxu0 0.0
        %765 = vmatprep.subr.mxu0 0.0
        %766 = vmatpush1.msra.mxu0 0.0
        %767 = vmatprep.subr.mxu0 0.0
        %768 = vmatpush1.msra.mxu0 0.0
        %769 = vmatprep.subr.mxu0 0.0
        %770 = vmatpush1.msra.mxu0 0.0
        %771 = vmatprep.subr.mxu0 0.0
        %772 = vmatpush1.msra.mxu0 0.0
        %773 = vmatprep.subr.mxu0 %v739
        %774 = vmatpush1.msra.mxu0 %v737
        %775 = vmatprep.subr.mxu0 0.0
        %776 = vmatpush2.msra.mxu0 0.0
        %777 = vmatprep.subr.mxu0 0.0
        %778 = vmatpush2.msra.mxu0 0.0
        %779 = vmatprep.subr.mxu0 0.0
        %780 = vmatpush2.msra.mxu0 0.0
        %781 = vmatprep.subr.mxu0 0.0
        %782 = vmatpush2.msra.mxu0 0.0
        %783 = vmatprep.subr.mxu0 0.0
        %784 = vmatpush2.msra.mxu0 0.0
        %785 = vmatprep.subr.mxu0 0.0
        %786 = vmatpush2.msra.mxu0 0.0
        %787 = vmatprep.subr.mxu0 0.0
        %788 = vmatpush2.msra.mxu0 0.0
        %789 = vmatprep.subr.mxu0 0.0
        %790 = vmatpush2.msra.mxu0 0.0
        %791 = vmatprep.subr.mxu0 0.0
        %792 = vmatpush2.msra.mxu0 0.0
        %793 = vmatprep.subr.mxu0 0.0
        %794 = vmatpush2.msra.mxu0 0.0
        %795 = vmatprep.subr.mxu0 0.0
        %796 = vmatpush2.msra.mxu0 0.0
        %797 = vmatprep.subr.mxu0 0.0
        %798 = vmatpush2.msra.mxu0 0.0
        %799 = vmatprep.subr.mxu0 0.0
        %800 = vmatpush2.msra.mxu0 0.0
        %801 = vmatprep.subr.mxu0 0.0
        %802 = vmatpush2.msra.mxu0 0.0
        %803 = vmatprep.subr.mxu0 0.0
        %804 = vmatpush2.msra.mxu0 0.0
        %805 = vmatprep.subr.mxu0 0.0
        %806 = vmatpush2.msra.mxu0 0.0
        %807 = vmatprep.mubr.f32.mxu0 0.0
        %808 = vmatmul.mubr.f32.gmra.mxu0 %v732
        %v809 = vpop.f32.mrf.mxu0
        %v810 = vadd.f32 0.0, %v809
        %v811 = vpop.f32.mrf.mxu0
        %v812 = vadd.f32 0.0, %v811
        %813 = vmatprep.mubr.f32.mxu0 0.0
        %814 = vmatmul.mubr.f32.gmra.mxu0 %v735
        %v815 = vpop.f32.mrf.mxu0
        %v816 = vadd.f32 0.0, %v815
        %v817 = vpop.f32.mrf.mxu0
        %v818 = vadd.f32 0.0, %v817
        %819 = vdwg.mxu0
        %820 = vmatprep.subr.mxu0 0.0
        %821 = vmatpush1.msra.mxu0 0.0
        %822 = vmatprep.subr.mxu0 0.0
        %823 = vmatpush1.msra.mxu0 0.0
        %824 = vmatprep.subr.mxu0 0.0
        %825 = vmatpush1.msra.mxu0 0.0
        %826 = vmatprep.subr.mxu0 0.0
        %827 = vmatpush1.msra.mxu0 0.0
        %828 = vmatprep.subr.mxu0 0.0
        %829 = vmatpush1.msra.mxu0 0.0
        %830 = vmatprep.subr.mxu0 0.0
        %831 = vmatpush1.msra.mxu0 0.0
        %832 = vmatprep.subr.mxu0 0.0
        %833 = vmatpush1.msra.mxu0 0.0
        %834 = vmatprep.subr.mxu0 0.0
        %835 = vmatpush1.msra.mxu0 0.0
        %836 = vmatprep.subr.mxu0 0.0
        %837 = vmatpush1.msra.mxu0 0.0
        %838 = vmatprep.subr.mxu0 0.0
        %839 = vmatpush1.msra.mxu0 0.0
        %840 = vmatprep.subr.mxu0 0.0
        %841 = vmatpush1.msra.mxu0 0.0
        %842 = vmatprep.subr.mxu0 0.0
        %843 = vmatpush1.msra.mxu0 0.0
        %844 = vmatprep.subr.mxu0 0.0
        %845 = vmatpush1.msra.mxu0 0.0
        %846 = vmatprep.subr.mxu0 0.0
        %847 = vmatpush1.msra.mxu0 0.0
        %848 = vmatprep.subr.mxu0 0.0
        %849 = vmatpush1.msra.mxu0 0.0
        %850 = vmatprep.subr.mxu0 0.0
        %851 = vmatpush1.msra.mxu0 %v741
        %852 = vmatprep.subr.mxu0 0.0
        %853 = vmatpush2.msra.mxu0 0.0
        %854 = vmatprep.subr.mxu0 0.0
        %855 = vmatpush2.msra.mxu0 0.0
        %856 = vmatprep.subr.mxu0 0.0
        %857 = vmatpush2.msra.mxu0 0.0
        %858 = vmatprep.subr.mxu0 0.0
        %859 = vmatpush2.msra.mxu0 0.0
        %860 = vmatprep.subr.mxu0 0.0
        %861 = vmatpush2.msra.mxu0 0.0
        %862 = vmatprep.subr.mxu0 0.0
        %863 = vmatpush2.msra.mxu0 0.0
        %864 = vmatprep.subr.mxu0 0.0
        %865 = vmatpush2.msra.mxu0 0.0
        %866 = vmatprep.subr.mxu0 0.0
        %867 = vmatpush2.msra.mxu0 0.0
        %868 = vmatprep.subr.mxu0 0.0
        %869 = vmatpush2.msra.mxu0 0.0
        %870 = vmatprep.subr.mxu0 0.0
        %871 = vmatpush2.msra.mxu0 0.0
        %872 = vmatprep.subr.mxu0 0.0
        %873 = vmatpush2.msra.mxu0 0.0
        %874 = vmatprep.subr.mxu0 0.0
        %875 = vmatpush2.msra.mxu0 0.0
        %876 = vmatprep.subr.mxu0 0.0
        %877 = vmatpush2.msra.mxu0 0.0
        %878 = vmatprep.subr.mxu0 0.0
        %879 = vmatpush2.msra.mxu0 0.0
        %880 = vmatprep.subr.mxu0 0.0
        %881 = vmatpush2.msra.mxu0 0.0
        %882 = vmatprep.subr.mxu0 0.0
        %883 = vmatpush2.msra.mxu0 0.0
        %884 = vmatprep.mubr.f32.mxu0 0.0
        %885 = vmatmul.mubr.f32.gmra.mxu0 %v732
        %v886 = vpop.f32.mrf.mxu0
        %v887 = vadd.f32 0.0, %v886
        %v888 = vpop.f32.mrf.mxu0
        %889 = vmatprep.mubr.f32.mxu0 0.0
        %890 = vmatmul.mubr.f32.gmra.mxu0 %v735
        %v891 = vpop.f32.mrf.mxu0
        %v892 = vadd.f32 0.0, %v891
        %v893 = vpop.f32.mrf.mxu0
        %894 = vdwg.mxu0
        %v895 = vadd.f32 %v708, %v810
        %v896 = vadd.f32 %v709, %v812
        %v897 = vadd.f32 %v710, %v887
        %v898 = vadd.f32 %v711, %v816
        %v899 = vadd.f32 %v712, %v818
        %v900 = vadd.f32 %v713, %v892
        %v901 = vld [vmem:[%s168] sm:$0xff]
        %v902 = vld [vmem:[%s168 + $0x8] sm:$0xf]
        %s903 = scalar_lea.vmem %s1, 64
        %v904 = vld [vmem:[%s903] sm:$0xff]
        %v905 = vld [vmem:[%s903 + $0x8] sm:$0xff]
        %v908 = vcombine.high %v901, %v901
        %909 = vrot.lane.b32.xlu0 %v901, 92
        %v910 = vpop.permute.xlu0 %909
        %911 = vrot.lane.b32.xlu0 %v908, 92
        %v912 = vpop.permute.xlu0 %911
        %913 = vrot.lane.b32.xlu0 %v902, 92
        %v914 = vpop.permute.xlu0 %913
        %vm915 = vcmask 752640
        %v916 = vsel %vm915, %v910, %v912
        %v917 = vsel %vm915, %v912, %v914
        %v919 = vsel %vm188, %v904, 0
        %v922 = vsel %vm188, %v905, 0
        %v924 = vsel %vm195, %v916, 0
        %v926 = vsel %vm195, %v917, 0
        %v928 = vsel %vm195, %v914, 0
        %930 = vmatprep.subr.mxu0 0.0
        %931 = vmatpush1.msra.mxu0 0.0
        %932 = vmatprep.subr.mxu0 0.0
        %933 = vmatpush1.msra.mxu0 0.0
        %934 = vmatprep.subr.mxu0 0.0
        %935 = vmatpush1.msra.mxu0 0.0
        %936 = vmatprep.subr.mxu0 0.0
        %937 = vmatpush1.msra.mxu0 0.0
        %938 = vmatprep.subr.mxu0 0.0
        %939 = vmatpush1.msra.mxu0 0.0
        %940 = vmatprep.subr.mxu0 0.0
        %941 = vmatpush1.msra.mxu0 0.0
        %942 = vmatprep.subr.mxu0 0.0
        %943 = vmatpush1.msra.mxu0 0.0
        %944 = vmatprep.subr.mxu0 0.0
        %945 = vmatpush1.msra.mxu0 0.0
        %946 = vmatprep.subr.mxu0 0.0
        %947 = vmatpush1.msra.mxu0 0.0
        %948 = vmatprep.subr.mxu0 0.0
        %949 = vmatpush1.msra.mxu0 0.0
        %950 = vmatprep.subr.mxu0 0.0
        %951 = vmatpush1.msra.mxu0 0.0
        %952 = vmatprep.subr.mxu0 0.0
        %953 = vmatpush1.msra.mxu0 0.0
        %954 = vmatprep.subr.mxu0 0.0
        %955 = vmatpush1.msra.mxu0 0.0
        %956 = vmatprep.subr.mxu0 0.0
        %957 = vmatpush1.msra.mxu0 0.0
        %958 = vmatprep.subr.mxu0 0.0
        %959 = vmatpush1.msra.mxu0 0.0
        %960 = vmatprep.subr.mxu0 %v926
        %961 = vmatpush1.msra.mxu0 %v924
        %962 = vmatprep.subr.mxu0 0.0
        %963 = vmatpush2.msra.mxu0 0.0
        %964 = vmatprep.subr.mxu0 0.0
        %965 = vmatpush2.msra.mxu0 0.0
        %966 = vmatprep.subr.mxu0 0.0
        %967 = vmatpush2.msra.mxu0 0.0
        %968 = vmatprep.subr.mxu0 0.0
        %969 = vmatpush2.msra.mxu0 0.0
        %970 = vmatprep.subr.mxu0 0.0
        %971 = vmatpush2.msra.mxu0 0.0
        %972 = vmatprep.subr.mxu0 0.0
        %973 = vmatpush2.msra.mxu0 0.0
        %974 = vmatprep.subr.mxu0 0.0
        %975 = vmatpush2.msra.mxu0 0.0
        %976 = vmatprep.subr.mxu0 0.0
        %977 = vmatpush2.msra.mxu0 0.0
        %978 = vmatprep.subr.mxu0 0.0
        %979 = vmatpush2.msra.mxu0 0.0
        %980 = vmatprep.subr.mxu0 0.0
        %981 = vmatpush2.msra.mxu0 0.0
        %982 = vmatprep.subr.mxu0 0.0
        %983 = vmatpush2.msra.mxu0 0.0
        %984 = vmatprep.subr.mxu0 0.0
        %985 = vmatpush2.msra.mxu0 0.0
        %986 = vmatprep.subr.mxu0 0.0
        %987 = vmatpush2.msra.mxu0 0.0
        %988 = vmatprep.subr.mxu0 0.0
        %989 = vmatpush2.msra.mxu0 0.0
        %990 = vmatprep.subr.mxu0 0.0
        %991 = vmatpush2.msra.mxu0 0.0
        %992 = vmatprep.subr.mxu0 0.0
        %993 = vmatpush2.msra.mxu0 0.0
        %994 = vmatprep.mubr.f32.mxu0 0.0
        %995 = vmatmul.mubr.f32.gmra.mxu0 %v919
        %v996 = vpop.f32.mrf.mxu0
        %v997 = vadd.f32 0.0, %v996
        %v998 = vpop.f32.mrf.mxu0
        %v999 = vadd.f32 0.0, %v998
        %1000 = vmatprep.mubr.f32.mxu0 0.0
        %1001 = vmatmul.mubr.f32.gmra.mxu0 %v922
        %v1002 = vpop.f32.mrf.mxu0
        %v1003 = vadd.f32 0.0, %v1002
        %v1004 = vpop.f32.mrf.mxu0
        %v1005 = vadd.f32 0.0, %v1004
        %1006 = vdwg.mxu0
        %1007 = vmatprep.subr.mxu0 0.0
        %1008 = vmatpush1.msra.mxu0 0.0
        %1009 = vmatprep.subr.mxu0 0.0
        %1010 = vmatpush1.msra.mxu0 0.0
        %1011 = vmatprep.subr.mxu0 0.0
        %1012 = vmatpush1.msra.mxu0 0.0
        %1013 = vmatprep.subr.mxu0 0.0
        %1014 = vmatpush1.msra.mxu0 0.0
        %1015 = vmatprep.subr.mxu0 0.0
        %1016 = vmatpush1.msra.mxu0 0.0
        %1017 = vmatprep.subr.mxu0 0.0
        %1018 = vmatpush1.msra.mxu0 0.0
        %1019 = vmatprep.subr.mxu0 0.0
        %1020 = vmatpush1.msra.mxu0 0.0
        %1021 = vmatprep.subr.mxu0 0.0
        %1022 = vmatpush1.msra.mxu0 0.0
        %1023 = vmatprep.subr.mxu0 0.0
        %1024 = vmatpush1.msra.mxu0 0.0
        %1025 = vmatprep.subr.mxu0 0.0
        %1026 = vmatpush1.msra.mxu0 0.0
        %1027 = vmatprep.subr.mxu0 0.0
        %1028 = vmatpush1.msra.mxu0 0.0
        %1029 = vmatprep.subr.mxu0 0.0
        %1030 = vmatpush1.msra.mxu0 0.0
        %1031 = vmatprep.subr.mxu0 0.0
        %1032 = vmatpush1.msra.mxu0 0.0
        %1033 = vmatprep.subr.mxu0 0.0
        %1034 = vmatpush1.msra.mxu0 0.0
        %1035 = vmatprep.subr.mxu0 0.0
        %1036 = vmatpush1.msra.mxu0 0.0
        %1037 = vmatprep.subr.mxu0 0.0
        %1038 = vmatpush1.msra.mxu0 %v928
        %1039 = vmatprep.subr.mxu0 0.0
        %1040 = vmatpush2.msra.mxu0 0.0
        %1041 = vmatprep.subr.mxu0 0.0
        %1042 = vmatpush2.msra.mxu0 0.0
        %1043 = vmatprep.subr.mxu0 0.0
        %1044 = vmatpush2.msra.mxu0 0.0
        %1045 = vmatprep.subr.mxu0 0.0
        %1046 = vmatpush2.msra.mxu0 0.0
        %1047 = vmatprep.subr.mxu0 0.0
        %1048 = vmatpush2.msra.mxu0 0.0
        %1049 = vmatprep.subr.mxu0 0.0
        %1050 = vmatpush2.msra.mxu0 0.0
        %1051 = vmatprep.subr.mxu0 0.0
        %1052 = vmatpush2.msra.mxu0 0.0
        %1053 = vmatprep.subr.mxu0 0.0
        %1054 = vmatpush2.msra.mxu0 0.0
        %1055 = vmatprep.subr.mxu0 0.0
        %1056 = vmatpush2.msra.mxu0 0.0
        %1057 = vmatprep.subr.mxu0 0.0
        %1058 = vmatpush2.msra.mxu0 0.0
        %1059 = vmatprep.subr.mxu0 0.0
        %1060 = vmatpush2.msra.mxu0 0.0
        %1061 = vmatprep.subr.mxu0 0.0
        %1062 = vmatpush2.msra.mxu0 0.0
        %1063 = vmatprep.subr.mxu0 0.0
        %1064 = vmatpush2.msra.mxu0 0.0
        %1065 = vmatprep.subr.mxu0 0.0
        %1066 = vmatpush2.msra.mxu0 0.0
        %1067 = vmatprep.subr.mxu0 0.0
        %1068 = vmatpush2.msra.mxu0 0.0
        %1069 = vmatprep.subr.mxu0 0.0
        %1070 = vmatpush2.msra.mxu0 0.0
        %1071 = vmatprep.mubr.f32.mxu0 0.0
        %1072 = vmatmul.mubr.f32.gmra.mxu0 %v919
        %v1073 = vpop.f32.mrf.mxu0
        %v1074 = vadd.f32 0.0, %v1073
        %v1075 = vpop.f32.mrf.mxu0
        %1076 = vmatprep.mubr.f32.mxu0 0.0
        %1077 = vmatmul.mubr.f32.gmra.mxu0 %v922
        %v1078 = vpop.f32.mrf.mxu0
        %v1079 = vadd.f32 0.0, %v1078
        %v1080 = vpop.f32.mrf.mxu0
        %1081 = vdwg.mxu0
        %v1082 = vadd.f32 %v895, %v997
        %v1083 = vadd.f32 %v896, %v999
        %v1084 = vadd.f32 %v897, %v1074
        %v1085 = vadd.f32 %v898, %v1003
        %v1086 = vadd.f32 %v899, %v1005
        %v1087 = vadd.f32 %v900, %v1079
        %v1088 = vld [vmem:[%s168] sm:$0xff]
        %v1089 = vld [vmem:[%s168 + $0x8] sm:$0xf]
        %s1090 = scalar_lea.vmem %s1, 80
        %v1091 = vld [vmem:[%s1090] sm:$0xff]
        %v1092 = vld [vmem:[%s1090 + $0x8] sm:$0xff]
        %v1095 = vcombine.high %v1088, %v1088
        %1096 = vrot.lane.b32.xlu0 %v1088, 91
        %v1097 = vpop.permute.xlu0 %1096
        %1098 = vrot.lane.b32.xlu0 %v1095, 91
        %v1099 = vpop.permute.xlu0 %1098
        %1100 = vrot.lane.b32.xlu0 %v1089, 91
        %v1101 = vpop.permute.xlu0 %1100
        %vm1102 = vcmask 744448
        %v1103 = vsel %vm1102, %v1097, %v1099
        %v1104 = vsel %vm1102, %v1099, %v1101
        %v1106 = vsel %vm188, %v1091, 0
        %v1109 = vsel %vm188, %v1092, 0
        %v1111 = vsel %vm195, %v1103, 0
        %v1113 = vsel %vm195, %v1104, 0
        %v1115 = vsel %vm195, %v1101, 0
        %1117 = vmatprep.subr.mxu0 0.0
        %1118 = vmatpush1.msra.mxu0 0.0
        %1119 = vmatprep.subr.mxu0 0.0
        %1120 = vmatpush1.msra.mxu0 0.0
        %1121 = vmatprep.subr.mxu0 0.0
        %1122 = vmatpush1.msra.mxu0 0.0
        %1123 = vmatprep.subr.mxu0 0.0
        %1124 = vmatpush1.msra.mxu0 0.0
        %1125 = vmatprep.subr.mxu0 0.0
        %1126 = vmatpush1.msra.mxu0 0.0
        %1127 = vmatprep.subr.mxu0 0.0
        %1128 = vmatpush1.msra.mxu0 0.0
        %1129 = vmatprep.subr.mxu0 0.0
        %1130 = vmatpush1.msra.mxu0 0.0
        %1131 = vmatprep.subr.mxu0 0.0
        %1132 = vmatpush1.msra.mxu0 0.0
        %1133 = vmatprep.subr.mxu0 0.0
        %1134 = vmatpush1.msra.mxu0 0.0
        %1135 = vmatprep.subr.mxu0 0.0
        %1136 = vmatpush1.msra.mxu0 0.0
        %1137 = vmatprep.subr.mxu0 0.0
        %1138 = vmatpush1.msra.mxu0 0.0
        %1139 = vmatprep.subr.mxu0 0.0
        %1140 = vmatpush1.msra.mxu0 0.0
        %1141 = vmatprep.subr.mxu0 0.0
        %1142 = vmatpush1.msra.mxu0 0.0
        %1143 = vmatprep.subr.mxu0 0.0
        %1144 = vmatpush1.msra.mxu0 0.0
        %1145 = vmatprep.subr.mxu0 0.0
        %1146 = vmatpush1.msra.mxu0 0.0
        %1147 = vmatprep.subr.mxu0 %v1113
        %1148 = vmatpush1.msra.mxu0 %v1111
        %1149 = vmatprep.subr.mxu0 0.0
        %1150 = vmatpush2.msra.mxu0 0.0
        %1151 = vmatprep.subr.mxu0 0.0
        %1152 = vmatpush2.msra.mxu0 0.0
        %1153 = vmatprep.subr.mxu0 0.0
        %1154 = vmatpush2.msra.mxu0 0.0
        %1155 = vmatprep.subr.mxu0 0.0
        %1156 = vmatpush2.msra.mxu0 0.0
        %1157 = vmatprep.subr.mxu0 0.0
        %1158 = vmatpush2.msra.mxu0 0.0
        %1159 = vmatprep.subr.mxu0 0.0
        %1160 = vmatpush2.msra.mxu0 0.0
        %1161 = vmatprep.subr.mxu0 0.0
        %1162 = vmatpush2.msra.mxu0 0.0
        %1163 = vmatprep.subr.mxu0 0.0
        %1164 = vmatpush2.msra.mxu0 0.0
        %1165 = vmatprep.subr.mxu0 0.0
        %1166 = vmatpush2.msra.mxu0 0.0
        %1167 = vmatprep.subr.mxu0 0.0
        %1168 = vmatpush2.msra.mxu0 0.0
        %1169 = vmatprep.subr.mxu0 0.0
        %1170 = vmatpush2.msra.mxu0 0.0
        %1171 = vmatprep.subr.mxu0 0.0
        %1172 = vmatpush2.msra.mxu0 0.0
        %1173 = vmatprep.subr.mxu0 0.0
        %1174 = vmatpush2.msra.mxu0 0.0
        %1175 = vmatprep.subr.mxu0 0.0
        %1176 = vmatpush2.msra.mxu0 0.0
        %1177 = vmatprep.subr.mxu0 0.0
        %1178 = vmatpush2.msra.mxu0 0.0
        %1179 = vmatprep.subr.mxu0 0.0
        %1180 = vmatpush2.msra.mxu0 0.0
        %1181 = vmatprep.mubr.f32.mxu0 0.0
        %1182 = vmatmul.mubr.f32.gmra.mxu0 %v1106
        %v1183 = vpop.f32.mrf.mxu0
        %v1184 = vadd.f32 0.0, %v1183
        %v1185 = vpop.f32.mrf.mxu0
        %v1186 = vadd.f32 0.0, %v1185
        %1187 = vmatprep.mubr.f32.mxu0 0.0
        %1188 = vmatmul.mubr.f32.gmra.mxu0 %v1109
        %v1189 = vpop.f32.mrf.mxu0
        %v1190 = vadd.f32 0.0, %v1189
        %v1191 = vpop.f32.mrf.mxu0
        %v1192 = vadd.f32 0.0, %v1191
        %1193 = vdwg.mxu0
        %1194 = vmatprep.subr.mxu0 0.0
        %1195 = vmatpush1.msra.mxu0 0.0
        %1196 = vmatprep.subr.mxu0 0.0
        %1197 = vmatpush1.msra.mxu0 0.0
        %1198 = vmatprep.subr.mxu0 0.0
        %1199 = vmatpush1.msra.mxu0 0.0
        %1200 = vmatprep.subr.mxu0 0.0
        %1201 = vmatpush1.msra.mxu0 0.0
        %1202 = vmatprep.subr.mxu0 0.0
        %1203 = vmatpush1.msra.mxu0 0.0
        %1204 = vmatprep.subr.mxu0 0.0
        %1205 = vmatpush1.msra.mxu0 0.0
        %1206 = vmatprep.subr.mxu0 0.0
        %1207 = vmatpush1.msra.mxu0 0.0
        %1208 = vmatprep.subr.mxu0 0.0
        %1209 = vmatpush1.msra.mxu0 0.0
        %1210 = vmatprep.subr.mxu0 0.0
        %1211 = vmatpush1.msra.mxu0 0.0
        %1212 = vmatprep.subr.mxu0 0.0
        %1213 = vmatpush1.msra.mxu0 0.0
        %1214 = vmatprep.subr.mxu0 0.0
        %1215 = vmatpush1.msra.mxu0 0.0
        %1216 = vmatprep.subr.mxu0 0.0
        %1217 = vmatpush1.msra.mxu0 0.0
        %1218 = vmatprep.subr.mxu0 0.0
        %1219 = vmatpush1.msra.mxu0 0.0
        %1220 = vmatprep.subr.mxu0 0.0
        %1221 = vmatpush1.msra.mxu0 0.0
        %1222 = vmatprep.subr.mxu0 0.0
        %1223 = vmatpush1.msra.mxu0 0.0
        %1224 = vmatprep.subr.mxu0 0.0
        %1225 = vmatpush1.msra.mxu0 %v1115
        %1226 = vmatprep.subr.mxu0 0.0
        %1227 = vmatpush2.msra.mxu0 0.0
        %1228 = vmatprep.subr.mxu0 0.0
        %1229 = vmatpush2.msra.mxu0 0.0
        %1230 = vmatprep.subr.mxu0 0.0
        %1231 = vmatpush2.msra.mxu0 0.0
        %1232 = vmatprep.subr.mxu0 0.0
        %1233 = vmatpush2.msra.mxu0 0.0
        %1234 = vmatprep.subr.mxu0 0.0
        %1235 = vmatpush2.msra.mxu0 0.0
        %1236 = vmatprep.subr.mxu0 0.0
        %1237 = vmatpush2.msra.mxu0 0.0
        %1238 = vmatprep.subr.mxu0 0.0
        %1239 = vmatpush2.msra.mxu0 0.0
        %1240 = vmatprep.subr.mxu0 0.0
        %1241 = vmatpush2.msra.mxu0 0.0
        %1242 = vmatprep.subr.mxu0 0.0
        %1243 = vmatpush2.msra.mxu0 0.0
        %1244 = vmatprep.subr.mxu0 0.0
        %1245 = vmatpush2.msra.mxu0 0.0
        %1246 = vmatprep.subr.mxu0 0.0
        %1247 = vmatpush2.msra.mxu0 0.0
        %1248 = vmatprep.subr.mxu0 0.0
        %1249 = vmatpush2.msra.mxu0 0.0
        %1250 = vmatprep.subr.mxu0 0.0
        %1251 = vmatpush2.msra.mxu0 0.0
        %1252 = vmatprep.subr.mxu0 0.0
        %1253 = vmatpush2.msra.mxu0 0.0
        %1254 = vmatprep.subr.mxu0 0.0
        %1255 = vmatpush2.msra.mxu0 0.0
        %1256 = vmatprep.subr.mxu0 0.0
        %1257 = vmatpush2.msra.mxu0 0.0
        %1258 = vmatprep.mubr.f32.mxu0 0.0
        %1259 = vmatmul.mubr.f32.gmra.mxu0 %v1106
        %v1260 = vpop.f32.mrf.mxu0
        %v1261 = vadd.f32 0.0, %v1260
        %v1262 = vpop.f32.mrf.mxu0
        %1263 = vmatprep.mubr.f32.mxu0 0.0
        %1264 = vmatmul.mubr.f32.gmra.mxu0 %v1109
        %v1265 = vpop.f32.mrf.mxu0
        %v1266 = vadd.f32 0.0, %v1265
        %v1267 = vpop.f32.mrf.mxu0
        %1268 = vdwg.mxu0
        %v1269 = vadd.f32 %v1082, %v1184
        %v1270 = vadd.f32 %v1083, %v1186
        %v1271 = vadd.f32 %v1084, %v1261
        %v1272 = vadd.f32 %v1085, %v1190
        %v1273 = vadd.f32 %v1086, %v1192
        %v1274 = vadd.f32 %v1087, %v1266
        %v1275 = vld [vmem:[%s168] sm:$0xff]
        %v1276 = vld [vmem:[%s168 + $0x8] sm:$0xf]
        %s1277 = scalar_lea.vmem %s1, 96
        %v1278 = vld [vmem:[%s1277] sm:$0xff]
        %v1279 = vld [vmem:[%s1277 + $0x8] sm:$0xff]
        %v1282 = vcombine.high %v1275, %v1275
        %1283 = vrot.lane.b32.xlu0 %v1275, 75
        %v1284 = vpop.permute.xlu0 %1283
        %1285 = vrot.lane.b32.xlu0 %v1282, 75
        %v1286 = vpop.permute.xlu0 %1285
        %1287 = vrot.lane.b32.xlu0 %v1276, 75
        %v1288 = vpop.permute.xlu0 %1287
        %vm1289 = vcmask 613376
        %v1290 = vsel %vm1289, %v1284, %v1286
        %v1291 = vsel %vm1289, %v1286, %v1288
        %v1293 = vsel %vm188, %v1278, 0
        %v1296 = vsel %vm188, %v1279, 0
        %v1298 = vsel %vm195, %v1290, 0
        %v1300 = vsel %vm195, %v1291, 0
        %v1302 = vsel %vm195, %v1288, 0
        %1304 = vmatprep.subr.mxu0 0.0
        %1305 = vmatpush1.msra.mxu0 0.0
        %1306 = vmatprep.subr.mxu0 0.0
        %1307 = vmatpush1.msra.mxu0 0.0
        %1308 = vmatprep.subr.mxu0 0.0
        %1309 = vmatpush1.msra.mxu0 0.0
        %1310 = vmatprep.subr.mxu0 0.0
        %1311 = vmatpush1.msra.mxu0 0.0
        %1312 = vmatprep.subr.mxu0 0.0
        %1313 = vmatpush1.msra.mxu0 0.0
        %1314 = vmatprep.subr.mxu0 0.0
        %1315 = vmatpush1.msra.mxu0 0.0
        %1316 = vmatprep.subr.mxu0 0.0
        %1317 = vmatpush1.msra.mxu0 0.0
        %1318 = vmatprep.subr.mxu0 0.0
        %1319 = vmatpush1.msra.mxu0 0.0
        %1320 = vmatprep.subr.mxu0 0.0
        %1321 = vmatpush1.msra.mxu0 0.0
        %1322 = vmatprep.subr.mxu0 0.0
        %1323 = vmatpush1.msra.mxu0 0.0
        %1324 = vmatprep.subr.mxu0 0.0
        %1325 = vmatpush1.msra.mxu0 0.0
        %1326 = vmatprep.subr.mxu0 0.0
        %1327 = vmatpush1.msra.mxu0 0.0
        %1328 = vmatprep.subr.mxu0 0.0
        %1329 = vmatpush1.msra.mxu0 0.0
        %1330 = vmatprep.subr.mxu0 0.0
        %1331 = vmatpush1.msra.mxu0 0.0
        %1332 = vmatprep.subr.mxu0 0.0
        %1333 = vmatpush1.msra.mxu0 0.0
        %1334 = vmatprep.subr.mxu0 %v1300
        %1335 = vmatpush1.msra.mxu0 %v1298
        %1336 = vmatprep.subr.mxu0 0.0
        %1337 = vmatpush2.msra.mxu0 0.0
        %1338 = vmatprep.subr.mxu0 0.0
        %1339 = vmatpush2.msra.mxu0 0.0
        %1340 = vmatprep.subr.mxu0 0.0
        %1341 = vmatpush2.msra.mxu0 0.0
        %1342 = vmatprep.subr.mxu0 0.0
        %1343 = vmatpush2.msra.mxu0 0.0
        %1344 = vmatprep.subr.mxu0 0.0
        %1345 = vmatpush2.msra.mxu0 0.0
        %1346 = vmatprep.subr.mxu0 0.0
        %1347 = vmatpush2.msra.mxu0 0.0
        %1348 = vmatprep.subr.mxu0 0.0
        %1349 = vmatpush2.msra.mxu0 0.0
        %1350 = vmatprep.subr.mxu0 0.0
        %1351 = vmatpush2.msra.mxu0 0.0
        %1352 = vmatprep.subr.mxu0 0.0
        %1353 = vmatpush2.msra.mxu0 0.0
        %1354 = vmatprep.subr.mxu0 0.0
        %1355 = vmatpush2.msra.mxu0 0.0
        %1356 = vmatprep.subr.mxu0 0.0
        %1357 = vmatpush2.msra.mxu0 0.0
        %1358 = vmatprep.subr.mxu0 0.0
        %1359 = vmatpush2.msra.mxu0 0.0
        %1360 = vmatprep.subr.mxu0 0.0
        %1361 = vmatpush2.msra.mxu0 0.0
        %1362 = vmatprep.subr.mxu0 0.0
        %1363 = vmatpush2.msra.mxu0 0.0
        %1364 = vmatprep.subr.mxu0 0.0
        %1365 = vmatpush2.msra.mxu0 0.0
        %1366 = vmatprep.subr.mxu0 0.0
        %1367 = vmatpush2.msra.mxu0 0.0
        %1368 = vmatprep.mubr.f32.mxu0 0.0
        %1369 = vmatmul.mubr.f32.gmra.mxu0 %v1293
        %v1370 = vpop.f32.mrf.mxu0
        %v1371 = vadd.f32 0.0, %v1370
        %v1372 = vpop.f32.mrf.mxu0
        %v1373 = vadd.f32 0.0, %v1372
        %1374 = vmatprep.mubr.f32.mxu0 0.0
        %1375 = vmatmul.mubr.f32.gmra.mxu0 %v1296
        %v1376 = vpop.f32.mrf.mxu0
        %v1377 = vadd.f32 0.0, %v1376
        %v1378 = vpop.f32.mrf.mxu0
        %v1379 = vadd.f32 0.0, %v1378
        %1380 = vdwg.mxu0
        %1381 = vmatprep.subr.mxu0 0.0
        %1382 = vmatpush1.msra.mxu0 0.0
        %1383 = vmatprep.subr.mxu0 0.0
        %1384 = vmatpush1.msra.mxu0 0.0
        %1385 = vmatprep.subr.mxu0 0.0
        %1386 = vmatpush1.msra.mxu0 0.0
        %1387 = vmatprep.subr.mxu0 0.0
        %1388 = vmatpush1.msra.mxu0 0.0
        %1389 = vmatprep.subr.mxu0 0.0
        %1390 = vmatpush1.msra.mxu0 0.0
        %1391 = vmatprep.subr.mxu0 0.0
        %1392 = vmatpush1.msra.mxu0 0.0
        %1393 = vmatprep.subr.mxu0 0.0
        %1394 = vmatpush1.msra.mxu0 0.0
        %1395 = vmatprep.subr.mxu0 0.0
        %1396 = vmatpush1.msra.mxu0 0.0
        %1397 = vmatprep.subr.mxu0 0.0
        %1398 = vmatpush1.msra.mxu0 0.0
        %1399 = vmatprep.subr.mxu0 0.0
        %1400 = vmatpush1.msra.mxu0 0.0
        %1401 = vmatprep.subr.mxu0 0.0
        %1402 = vmatpush1.msra.mxu0 0.0
        %1403 = vmatprep.subr.mxu0 0.0
        %1404 = vmatpush1.msra.mxu0 0.0
        %1405 = vmatprep.subr.mxu0 0.0
        %1406 = vmatpush1.msra.mxu0 0.0
        %1407 = vmatprep.subr.mxu0 0.0
        %1408 = vmatpush1.msra.mxu0 0.0
        %1409 = vmatprep.subr.mxu0 0.0
        %1410 = vmatpush1.msra.mxu0 0.0
        %1411 = vmatprep.subr.mxu0 0.0
        %1412 = vmatpush1.msra.mxu0 %v1302
        %1413 = vmatprep.subr.mxu0 0.0
        %1414 = vmatpush2.msra.mxu0 0.0
        %1415 = vmatprep.subr.mxu0 0.0
        %1416 = vmatpush2.msra.mxu0 0.0
        %1417 = vmatprep.subr.mxu0 0.0
        %1418 = vmatpush2.msra.mxu0 0.0
        %1419 = vmatprep.subr.mxu0 0.0
        %1420 = vmatpush2.msra.mxu0 0.0
        %1421 = vmatprep.subr.mxu0 0.0
        %1422 = vmatpush2.msra.mxu0 0.0
        %1423 = vmatprep.subr.mxu0 0.0
        %1424 = vmatpush2.msra.mxu0 0.0
        %1425 = vmatprep.subr.mxu0 0.0
        %1426 = vmatpush2.msra.mxu0 0.0
        %1427 = vmatprep.subr.mxu0 0.0
        %1428 = vmatpush2.msra.mxu0 0.0
        %1429 = vmatprep.subr.mxu0 0.0
        %1430 = vmatpush2.msra.mxu0 0.0
        %1431 = vmatprep.subr.mxu0 0.0
        %1432 = vmatpush2.msra.mxu0 0.0
        %1433 = vmatprep.subr.mxu0 0.0
        %1434 = vmatpush2.msra.mxu0 0.0
        %1435 = vmatprep.subr.mxu0 0.0
        %1436 = vmatpush2.msra.mxu0 0.0
        %1437 = vmatprep.subr.mxu0 0.0
        %1438 = vmatpush2.msra.mxu0 0.0
        %1439 = vmatprep.subr.mxu0 0.0
        %1440 = vmatpush2.msra.mxu0 0.0
        %1441 = vmatprep.subr.mxu0 0.0
        %1442 = vmatpush2.msra.mxu0 0.0
        %1443 = vmatprep.subr.mxu0 0.0
        %1444 = vmatpush2.msra.mxu0 0.0
        %1445 = vmatprep.mubr.f32.mxu0 0.0
        %1446 = vmatmul.mubr.f32.gmra.mxu0 %v1293
        %v1447 = vpop.f32.mrf.mxu0
        %v1448 = vadd.f32 0.0, %v1447
        %v1449 = vpop.f32.mrf.mxu0
        %1450 = vmatprep.mubr.f32.mxu0 0.0
        %1451 = vmatmul.mubr.f32.gmra.mxu0 %v1296
        %v1452 = vpop.f32.mrf.mxu0
        %v1453 = vadd.f32 0.0, %v1452
        %v1454 = vpop.f32.mrf.mxu0
        %1455 = vdwg.mxu0
        %v1456 = vadd.f32 %v1269, %v1371
        %v1457 = vadd.f32 %v1270, %v1373
        %v1458 = vadd.f32 %v1271, %v1448
        %v1459 = vadd.f32 %v1272, %v1377
        %v1460 = vadd.f32 %v1273, %v1379
        %v1461 = vadd.f32 %v1274, %v1453
        %v1462 = vld [vmem:[%s168] sm:$0xff]
        %v1463 = vld [vmem:[%s168 + $0x8] sm:$0xf]
        %s1464 = scalar_lea.vmem %s1, 112
        %v1465 = vld [vmem:[%s1464] sm:$0xff]
        %v1466 = vld [vmem:[%s1464 + $0x8] sm:$0xff]
        %v1469 = vcombine.high %v1462, %v1462
        %1470 = vrot.lane.b32.xlu0 %v1462, 74
        %v1471 = vpop.permute.xlu0 %1470
        %1472 = vrot.lane.b32.xlu0 %v1469, 74
        %v1473 = vpop.permute.xlu0 %1472
        %1474 = vrot.lane.b32.xlu0 %v1463, 74
        %v1475 = vpop.permute.xlu0 %1474
        %vm1476 = vcmask 605184
        %v1477 = vsel %vm1476, %v1471, %v1473
        %v1478 = vsel %vm1476, %v1473, %v1475
        %v1480 = vsel %vm188, %v1465, 0
        %v1483 = vsel %vm188, %v1466, 0
        %v1485 = vsel %vm195, %v1477, 0
        %v1487 = vsel %vm195, %v1478, 0
        %v1489 = vsel %vm195, %v1475, 0
        %1491 = vmatprep.subr.mxu0 0.0
        %1492 = vmatpush1.msra.mxu0 0.0
        %1493 = vmatprep.subr.mxu0 0.0
        %1494 = vmatpush1.msra.mxu0 0.0
        %1495 = vmatprep.subr.mxu0 0.0
        %1496 = vmatpush1.msra.mxu0 0.0
        %1497 = vmatprep.subr.mxu0 0.0
        %1498 = vmatpush1.msra.mxu0 0.0
        %1499 = vmatprep.subr.mxu0 0.0
        %1500 = vmatpush1.msra.mxu0 0.0
        %1501 = vmatprep.subr.mxu0 0.0
        %1502 = vmatpush1.msra.mxu0 0.0
        %1503 = vmatprep.subr.mxu0 0.0
        %1504 = vmatpush1.msra.mxu0 0.0
        %1505 = vmatprep.subr.mxu0 0.0
        %1506 = vmatpush1.msra.mxu0 0.0
        %1507 = vmatprep.subr.mxu0 0.0
        %1508 = vmatpush1.msra.mxu0 0.0
        %1509 = vmatprep.subr.mxu0 0.0
        %1510 = vmatpush1.msra.mxu0 0.0
        %1511 = vmatprep.subr.mxu0 0.0
        %1512 = vmatpush1.msra.mxu0 0.0
        %1513 = vmatprep.subr.mxu0 0.0
        %1514 = vmatpush1.msra.mxu0 0.0
        %1515 = vmatprep.subr.mxu0 0.0
        %1516 = vmatpush1.msra.mxu0 0.0
        %1517 = vmatprep.subr.mxu0 0.0
        %1518 = vmatpush1.msra.mxu0 0.0
        %1519 = vmatprep.subr.mxu0 0.0
        %1520 = vmatpush1.msra.mxu0 0.0
        %1521 = vmatprep.subr.mxu0 %v1487
        %1522 = vmatpush1.msra.mxu0 %v1485
        %1523 = vmatprep.subr.mxu0 0.0
        %1524 = vmatpush2.msra.mxu0 0.0
        %1525 = vmatprep.subr.mxu0 0.0
        %1526 = vmatpush2.msra.mxu0 0.0
        %1527 = vmatprep.subr.mxu0 0.0
        %1528 = vmatpush2.msra.mxu0 0.0
        %1529 = vmatprep.subr.mxu0 0.0
        %1530 = vmatpush2.msra.mxu0 0.0
        %1531 = vmatprep.subr.mxu0 0.0
        %1532 = vmatpush2.msra.mxu0 0.0
        %1533 = vmatprep.subr.mxu0 0.0
        %1534 = vmatpush2.msra.mxu0 0.0
        %1535 = vmatprep.subr.mxu0 0.0
        %1536 = vmatpush2.msra.mxu0 0.0
        %1537 = vmatprep.subr.mxu0 0.0
        %1538 = vmatpush2.msra.mxu0 0.0
        %1539 = vmatprep.subr.mxu0 0.0
        %1540 = vmatpush2.msra.mxu0 0.0
        %1541 = vmatprep.subr.mxu0 0.0
        %1542 = vmatpush2.msra.mxu0 0.0
        %1543 = vmatprep.subr.mxu0 0.0
        %1544 = vmatpush2.msra.mxu0 0.0
        %1545 = vmatprep.subr.mxu0 0.0
        %1546 = vmatpush2.msra.mxu0 0.0
        %1547 = vmatprep.subr.mxu0 0.0
        %1548 = vmatpush2.msra.mxu0 0.0
        %1549 = vmatprep.subr.mxu0 0.0
        %1550 = vmatpush2.msra.mxu0 0.0
        %1551 = vmatprep.subr.mxu0 0.0
        %1552 = vmatpush2.msra.mxu0 0.0
        %1553 = vmatprep.subr.mxu0 0.0
        %1554 = vmatpush2.msra.mxu0 0.0
        %1555 = vmatprep.mubr.f32.mxu0 0.0
        %1556 = vmatmul.mubr.f32.gmra.mxu0 %v1480
        %v1557 = vpop.f32.mrf.mxu0
        %v1558 = vadd.f32 0.0, %v1557
        %v1559 = vpop.f32.mrf.mxu0
        %v1560 = vadd.f32 0.0, %v1559
        %1561 = vmatprep.mubr.f32.mxu0 0.0
        %1562 = vmatmul.mubr.f32.gmra.mxu0 %v1483
        %v1563 = vpop.f32.mrf.mxu0
        %v1564 = vadd.f32 0.0, %v1563
        %v1565 = vpop.f32.mrf.mxu0
        %v1566 = vadd.f32 0.0, %v1565
        %1567 = vdwg.mxu0
        %1568 = vmatprep.subr.mxu0 0.0
        %1569 = vmatpush1.msra.mxu0 0.0
        %1570 = vmatprep.subr.mxu0 0.0
        %1571 = vmatpush1.msra.mxu0 0.0
        %1572 = vmatprep.subr.mxu0 0.0
        %1573 = vmatpush1.msra.mxu0 0.0
        %1574 = vmatprep.subr.mxu0 0.0
        %1575 = vmatpush1.msra.mxu0 0.0
        %1576 = vmatprep.subr.mxu0 0.0
        %1577 = vmatpush1.msra.mxu0 0.0
        %1578 = vmatprep.subr.mxu0 0.0
        %1579 = vmatpush1.msra.mxu0 0.0
        %1580 = vmatprep.subr.mxu0 0.0
        %1581 = vmatpush1.msra.mxu0 0.0
        %1582 = vmatprep.subr.mxu0 0.0
        %1583 = vmatpush1.msra.mxu0 0.0
        %1584 = vmatprep.subr.mxu0 0.0
        %1585 = vmatpush1.msra.mxu0 0.0
        %1586 = vmatprep.subr.mxu0 0.0
        %1587 = vmatpush1.msra.mxu0 0.0
        %1588 = vmatprep.subr.mxu0 0.0
        %1589 = vmatpush1.msra.mxu0 0.0
        %1590 = vmatprep.subr.mxu0 0.0
        %1591 = vmatpush1.msra.mxu0 0.0
        %1592 = vmatprep.subr.mxu0 0.0
        %1593 = vmatpush1.msra.mxu0 0.0
        %1594 = vmatprep.subr.mxu0 0.0
        %1595 = vmatpush1.msra.mxu0 0.0
        %1596 = vmatprep.subr.mxu0 0.0
        %1597 = vmatpush1.msra.mxu0 0.0
        %1598 = vmatprep.subr.mxu0 0.0
        %1599 = vmatpush1.msra.mxu0 %v1489
        %1600 = vmatprep.subr.mxu0 0.0
        %1601 = vmatpush2.msra.mxu0 0.0
        %1602 = vmatprep.subr.mxu0 0.0
        %1603 = vmatpush2.msra.mxu0 0.0
        %1604 = vmatprep.subr.mxu0 0.0
        %1605 = vmatpush2.msra.mxu0 0.0
        %1606 = vmatprep.subr.mxu0 0.0
        %1607 = vmatpush2.msra.mxu0 0.0
        %1608 = vmatprep.subr.mxu0 0.0
        %1609 = vmatpush2.msra.mxu0 0.0
        %1610 = vmatprep.subr.mxu0 0.0
        %1611 = vmatpush2.msra.mxu0 0.0
        %1612 = vmatprep.subr.mxu0 0.0
        %1613 = vmatpush2.msra.mxu0 0.0
        %1614 = vmatprep.subr.mxu0 0.0
        %1615 = vmatpush2.msra.mxu0 0.0
        %1616 = vmatprep.subr.mxu0 0.0
        %1617 = vmatpush2.msra.mxu0 0.0
        %1618 = vmatprep.subr.mxu0 0.0
        %1619 = vmatpush2.msra.mxu0 0.0
        %1620 = vmatprep.subr.mxu0 0.0
        %1621 = vmatpush2.msra.mxu0 0.0
        %1622 = vmatprep.subr.mxu0 0.0
        %1623 = vmatpush2.msra.mxu0 0.0
        %1624 = vmatprep.subr.mxu0 0.0
        %1625 = vmatpush2.msra.mxu0 0.0
        %1626 = vmatprep.subr.mxu0 0.0
        %1627 = vmatpush2.msra.mxu0 0.0
        %1628 = vmatprep.subr.mxu0 0.0
        %1629 = vmatpush2.msra.mxu0 0.0
        %1630 = vmatprep.subr.mxu0 0.0
        %1631 = vmatpush2.msra.mxu0 0.0
        %1632 = vmatprep.mubr.f32.mxu0 0.0
        %1633 = vmatmul.mubr.f32.gmra.mxu0 %v1480
        %v1634 = vpop.f32.mrf.mxu0
        %v1635 = vadd.f32 0.0, %v1634
        %v1636 = vpop.f32.mrf.mxu0
        %1637 = vmatprep.mubr.f32.mxu0 0.0
        %1638 = vmatmul.mubr.f32.gmra.mxu0 %v1483
        %v1639 = vpop.f32.mrf.mxu0
        %v1640 = vadd.f32 0.0, %v1639
        %v1641 = vpop.f32.mrf.mxu0
        %1642 = vdwg.mxu0
        %v1643 = vadd.f32 %v1456, %v1558
        %v1644 = vadd.f32 %v1457, %v1560
        %v1645 = vadd.f32 %v1458, %v1635
        %v1646 = vadd.f32 %v1459, %v1564
        %v1647 = vadd.f32 %v1460, %v1566
        %v1648 = vadd.f32 %v1461, %v1640
        %v1649 = vld [vmem:[%s168] sm:$0xff]
        %v1650 = vld [vmem:[%s168 + $0x8] sm:$0xf]
        %s1651 = scalar_lea.vmem %s1, 128
        %v1652 = vld [vmem:[%s1651] sm:$0xff]
        %v1653 = vld [vmem:[%s1651 + $0x8] sm:$0xff]
        %v1656 = vcombine.high %v1649, %v1649
        %1657 = vrot.lane.b32.xlu0 %v1649, 73
        %v1658 = vpop.permute.xlu0 %1657
        %1659 = vrot.lane.b32.xlu0 %v1656, 73
        %v1660 = vpop.permute.xlu0 %1659
        %1661 = vrot.lane.b32.xlu0 %v1650, 73
        %v1662 = vpop.permute.xlu0 %1661
        %vm1663 = vcmask 596992
        %v1664 = vsel %vm1663, %v1658, %v1660
        %v1665 = vsel %vm1663, %v1660, %v1662
        %v1667 = vsel %vm188, %v1652, 0
        %v1670 = vsel %vm188, %v1653, 0
        %v1672 = vsel %vm195, %v1664, 0
        %v1674 = vsel %vm195, %v1665, 0
        %v1676 = vsel %vm195, %v1662, 0
        %1678 = vmatprep.subr.mxu0 0.0
        %1679 = vmatpush1.msra.mxu0 0.0
        %1680 = vmatprep.subr.mxu0 0.0
        %1681 = vmatpush1.msra.mxu0 0.0
        %1682 = vmatprep.subr.mxu0 0.0
        %1683 = vmatpush1.msra.mxu0 0.0
        %1684 = vmatprep.subr.mxu0 0.0
        %1685 = vmatpush1.msra.mxu0 0.0
        %1686 = vmatprep.subr.mxu0 0.0
        %1687 = vmatpush1.msra.mxu0 0.0
        %1688 = vmatprep.subr.mxu0 0.0
        %1689 = vmatpush1.msra.mxu0 0.0
        %1690 = vmatprep.subr.mxu0 0.0
        %1691 = vmatpush1.msra.mxu0 0.0
        %1692 = vmatprep.subr.mxu0 0.0
        %1693 = vmatpush1.msra.mxu0 0.0
        %1694 = vmatprep.subr.mxu0 0.0
        %1695 = vmatpush1.msra.mxu0 0.0
        %1696 = vmatprep.subr.mxu0 0.0
        %1697 = vmatpush1.msra.mxu0 0.0
        %1698 = vmatprep.subr.mxu0 0.0
        %1699 = vmatpush1.msra.mxu0 0.0
        %1700 = vmatprep.subr.mxu0 0.0
        %1701 = vmatpush1.msra.mxu0 0.0
        %1702 = vmatprep.subr.mxu0 0.0
        %1703 = vmatpush1.msra.mxu0 0.0
        %1704 = vmatprep.subr.mxu0 0.0
        %1705 = vmatpush1.msra.mxu0 0.0
        %1706 = vmatprep.subr.mxu0 0.0
        %1707 = vmatpush1.msra.mxu0 0.0
        %1708 = vmatprep.subr.mxu0 %v1674
        %1709 = vmatpush1.msra.mxu0 %v1672
        %1710 = vmatprep.subr.mxu0 0.0
        %1711 = vmatpush2.msra.mxu0 0.0
        %1712 = vmatprep.subr.mxu0 0.0
        %1713 = vmatpush2.msra.mxu0 0.0
        %1714 = vmatprep.subr.mxu0 0.0
        %1715 = vmatpush2.msra.mxu0 0.0
        %1716 = vmatprep.subr.mxu0 0.0
        %1717 = vmatpush2.msra.mxu0 0.0
        %1718 = vmatprep.subr.mxu0 0.0
        %1719 = vmatpush2.msra.mxu0 0.0
        %1720 = vmatprep.subr.mxu0 0.0
        %1721 = vmatpush2.msra.mxu0 0.0
        %1722 = vmatprep.subr.mxu0 0.0
        %1723 = vmatpush2.msra.mxu0 0.0
        %1724 = vmatprep.subr.mxu0 0.0
        %1725 = vmatpush2.msra.mxu0 0.0
        %1726 = vmatprep.subr.mxu0 0.0
        %1727 = vmatpush2.msra.mxu0 0.0
        %1728 = vmatprep.subr.mxu0 0.0
        %1729 = vmatpush2.msra.mxu0 0.0
        %1730 = vmatprep.subr.mxu0 0.0
        %1731 = vmatpush2.msra.mxu0 0.0
        %1732 = vmatprep.subr.mxu0 0.0
        %1733 = vmatpush2.msra.mxu0 0.0
        %1734 = vmatprep.subr.mxu0 0.0
        %1735 = vmatpush2.msra.mxu0 0.0
        %1736 = vmatprep.subr.mxu0 0.0
        %1737 = vmatpush2.msra.mxu0 0.0
        %1738 = vmatprep.subr.mxu0 0.0
        %1739 = vmatpush2.msra.mxu0 0.0
        %1740 = vmatprep.subr.mxu0 0.0
        %1741 = vmatpush2.msra.mxu0 0.0
        %1742 = vmatprep.mubr.f32.mxu0 0.0
        %1743 = vmatmul.mubr.f32.gmra.mxu0 %v1667
        %v1744 = vpop.f32.mrf.mxu0
        %v1745 = vadd.f32 0.0, %v1744
        %v1746 = vpop.f32.mrf.mxu0
        %v1747 = vadd.f32 0.0, %v1746
        %1748 = vmatprep.mubr.f32.mxu0 0.0
        %1749 = vmatmul.mubr.f32.gmra.mxu0 %v1670
        %v1750 = vpop.f32.mrf.mxu0
        %v1751 = vadd.f32 0.0, %v1750
        %v1752 = vpop.f32.mrf.mxu0
        %v1753 = vadd.f32 0.0, %v1752
        %1754 = vdwg.mxu0
        %1755 = vmatprep.subr.mxu0 0.0
        %1756 = vmatpush1.msra.mxu0 0.0
        %1757 = vmatprep.subr.mxu0 0.0
        %1758 = vmatpush1.msra.mxu0 0.0
        %1759 = vmatprep.subr.mxu0 0.0
        %1760 = vmatpush1.msra.mxu0 0.0
        %1761 = vmatprep.subr.mxu0 0.0
        %1762 = vmatpush1.msra.mxu0 0.0
        %1763 = vmatprep.subr.mxu0 0.0
        %1764 = vmatpush1.msra.mxu0 0.0
        %1765 = vmatprep.subr.mxu0 0.0
        %1766 = vmatpush1.msra.mxu0 0.0
        %1767 = vmatprep.subr.mxu0 0.0
        %1768 = vmatpush1.msra.mxu0 0.0
        %1769 = vmatprep.subr.mxu0 0.0
        %1770 = vmatpush1.msra.mxu0 0.0
        %1771 = vmatprep.subr.mxu0 0.0
        %1772 = vmatpush1.msra.mxu0 0.0
        %1773 = vmatprep.subr.mxu0 0.0
        %1774 = vmatpush1.msra.mxu0 0.0
        %1775 = vmatprep.subr.mxu0 0.0
        %1776 = vmatpush1.msra.mxu0 0.0
        %1777 = vmatprep.subr.mxu0 0.0
        %1778 = vmatpush1.msra.mxu0 0.0
        %1779 = vmatprep.subr.mxu0 0.0
        %1780 = vmatpush1.msra.mxu0 0.0
        %1781 = vmatprep.subr.mxu0 0.0
        %1782 = vmatpush1.msra.mxu0 0.0
        %1783 = vmatprep.subr.mxu0 0.0
        %1784 = vmatpush1.msra.mxu0 0.0
        %1785 = vmatprep.subr.mxu0 0.0
        %1786 = vmatpush1.msra.mxu0 %v1676
        %1787 = vmatprep.subr.mxu0 0.0
        %1788 = vmatpush2.msra.mxu0 0.0
        %1789 = vmatprep.subr.mxu0 0.0
        %1790 = vmatpush2.msra.mxu0 0.0
        %1791 = vmatprep.subr.mxu0 0.0
        %1792 = vmatpush2.msra.mxu0 0.0
        %1793 = vmatprep.subr.mxu0 0.0
        %1794 = vmatpush2.msra.mxu0 0.0
        %1795 = vmatprep.subr.mxu0 0.0
        %1796 = vmatpush2.msra.mxu0 0.0
        %1797 = vmatprep.subr.mxu0 0.0
        %1798 = vmatpush2.msra.mxu0 0.0
        %1799 = vmatprep.subr.mxu0 0.0
        %1800 = vmatpush2.msra.mxu0 0.0
        %1801 = vmatprep.subr.mxu0 0.0
        %1802 = vmatpush2.msra.mxu0 0.0
        %1803 = vmatprep.subr.mxu0 0.0
        %1804 = vmatpush2.msra.mxu0 0.0
        %1805 = vmatprep.subr.mxu0 0.0
        %1806 = vmatpush2.msra.mxu0 0.0
        %1807 = vmatprep.subr.mxu0 0.0
        %1808 = vmatpush2.msra.mxu0 0.0
        %1809 = vmatprep.subr.mxu0 0.0
        %1810 = vmatpush2.msra.mxu0 0.0
        %1811 = vmatprep.subr.mxu0 0.0
        %1812 = vmatpush2.msra.mxu0 0.0
        %1813 = vmatprep.subr.mxu0 0.0
        %1814 = vmatpush2.msra.mxu0 0.0
        %1815 = vmatprep.subr.mxu0 0.0
        %1816 = vmatpush2.msra.mxu0 0.0
        %1817 = vmatprep.subr.mxu0 0.0
        %1818 = vmatpush2.msra.mxu0 0.0
        %1819 = vmatprep.mubr.f32.mxu0 0.0
        %1820 = vmatmul.mubr.f32.gmra.mxu0 %v1667
        %v1821 = vpop.f32.mrf.mxu0
        %v1822 = vadd.f32 0.0, %v1821
        %v1823 = vpop.f32.mrf.mxu0
        %1824 = vmatprep.mubr.f32.mxu0 0.0
        %1825 = vmatmul.mubr.f32.gmra.mxu0 %v1670
        %v1826 = vpop.f32.mrf.mxu0
        %v1827 = vadd.f32 0.0, %v1826
        %v1828 = vpop.f32.mrf.mxu0
        %1829 = vdwg.mxu0
        %v1830 = vadd.f32 %v1643, %v1745
        %v1831 = vadd.f32 %v1644, %v1747
        %v1832 = vadd.f32 %v1645, %v1822
        %v1833 = vadd.f32 %v1646, %v1751
        %v1834 = vadd.f32 %v1647, %v1753
        %v1835 = vadd.f32 %v1648, %v1827
        %v1836 = vld [vmem:[%s2] sm:$0xff]
        %v1837 = vld [vmem:[%s2 + $0x8] sm:$0xff]
        %1839 = vset.pattern.permute.xlu0 0
        %1840 = vperm.xlu0 %1839, %v1836
        %v1841 = vpop.permute.xlu0 %1840
        %1844 = vset.pattern.permute.xlu0 0
        %1845 = vperm.xlu0 %1844, %v1837
        %v1846 = vpop.permute.xlu0 %1845
        %v1848 = vadd.f32 %v1830, %v1841
        %v1849 = vadd.f32 %v1831, %v1841
        %v1850 = vadd.f32 %v1832, %v1841
        %v1851 = vadd.f32 %v1833, %v1846
        %v1852 = vadd.f32 %v1834, %v1846
        %v1853 = vadd.f32 %v1835, %v1846
        %1854 = vst [vmem:[%s163] sm:$0xff] %v1848
        %1855 = vst [vmem:[%s163 + $0x8] sm:$0xff] %v1849
        %vm1856 = vcmask 261120
        %1857 = vst.msk [vmem:[%s163 + $0x10] sm:$0xff] %vm1856, %v1850
        %1858 = vst [vmem:[%s163 + $0x18] sm:$0xff] %v1851
        %1859 = vst [vmem:[%s163 + $0x20] sm:$0xff] %v1852
        %1860 = vst.msk [vmem:[%s163 + $0x28] sm:$0xff] %vm1856, %v1853
        %s1861 = sand.u32 %s93, 1
        %s1862 = scalar_lea.sflag [#allocation3], %s1861
        %s1863 = sand.u32 %s93, 1
        %s1864 = smul.addr %s1863, 48
        %s1865 = scalar_lea.vmem [#allocation2], %s1864
        // Predicated region
        $region33: #{tpu_custom_call.1} parent=31 // pred_check
          %p1866 = pneg %p103
        $region34: #{tpu_custom_call.1} parent=31 // pred_check_branch
          %1868 = sbr.rel (%p1866) target = $region36
        $region35: #{tpu_custom_call.1} parent=31 // pred_region
          %s1870 = ssub.s32 768, 768
          %1871 = vsyncadd %s1862, %s1870
          %s1872 = smul.addr %s17, 6
          %s1873 = smul.addr %s1872, 128
          %s1874 = scalar_lea.hbm %s3, %s1873
          %s1875 = sshll.u32 %s1865, 4
          %s1876 = int_to_ptr.vmem [resolvable:$true] %s1875
          %1881 = dma.vmem_to_hbm [thread:$0]  %s1876, 768, %s1874, %s1862, 384, 384, 24
        $region36: #{tpu_custom_call.1} parent=31 // pred_fallthru
          _
      $region32: #{tpu_custom_call.1} parent=5 // pred_fallthru
        _
      %p1882 = scmp.le.s32.totalorder 2, %s12
      // Predicated region
      $region37: #{tpu_custom_call.1} parent=5 // pred_check
        %p1883 = pneg %p1882
      $region38: #{tpu_custom_call.1} parent=5 // pred_check_branch
        %1885 = sbr.rel (%p1883) target = $region40
      $region39: #{tpu_custom_call.1} parent=5 // pred_region
        %s1886 = ssub.s32 %s12, 2
        // Predicated region
        $region41: #{tpu_custom_call.1} parent=39 // pred_check
          %p1887 = pneg %p109
        $region42: #{tpu_custom_call.1} parent=39 // pred_check_branch
          %1889 = sbr.rel (%p1887) target = $region44
        $region43: #{tpu_custom_call.1} parent=39 // pred_region
          %s1890 = sand.u32 %s94, 1
          %s1891 = scalar_lea.sflag [#allocation3], %s1890
          %s1892 = sand.u32 %s94, 1
          %s1893 = smul.addr %s1892, 48
          %s1894 = scalar_lea.vmem [#allocation2], %s1893
          %1895 = dma.done %s1891, 768
        $region44: #{tpu_custom_call.1} parent=39 // pred_fallthru
          _
      $region40: #{tpu_custom_call.1} parent=5 // pred_fallthru
        _
    $region6: #{tpu_custom_call.1} parent=1 // loop_footer
      %s16 = sadd.s32 1, %s12
    $region7: #{tpu_custom_call.1} parent=1 // loop_footer_branch
      %11 = sbr.rel target = $region3
    $region8: #{tpu_custom_call.1} parent=1 // loop_exit
      _
    %1896 = vsyncpa [#allocation3], 1
    %s1897 = scalar_lea.sflag [#allocation3], 1
    %1898 = vsyncpa %s1897, 1

</llo_original>
